<compile_context>
chip_gen: v6e
topology: v6e:2x2x1
jax: 0.10.0
libtpu: 0.0.40
codegen_flags: <defaults>
</compile_context>

<pallas_src>
import functools

import jax
import jax.numpy as jnp
from jax import lax
from jax.experimental import pallas as pl
from jax.experimental.pallas import tpu as pltpu


def _birnn_kernel(xf_ref, xb_ref, mask_ref, wih_f_ref, wih_b_ref,
                  whh_ref, b_ref, out_ref, h_ref, proj_ref):
    # xf_ref / xb_ref : (Tt, B, D)   time-major tiles of the two streams
    # mask_ref        : (Tt, B, 1)   float mask (1.0 keep step, 0.0 carry h)
    # wih_f_ref/_b    : (D, H)       pre-transposed input weights
    # whh_ref         : (2H, 2H)     block-diagonal recurrent weight (transposed)
    # b_ref           : (1, 2H)      fused bias [b_ih_f+b_hh_f | b_ih_b+b_hh_b]
    # out_ref         : (Tt, B, 2H)  hidden states (fwd || bwd on last dim)
    # h_ref           : (B, 2H)      VMEM scratch: hidden carried across tiles
    # proj_ref        : (Tt, B, 2H)  VMEM scratch: hoisted input projection
    @pl.when(pl.program_id(0) == 0)
    def _():
        h_ref[...] = jnp.zeros_like(h_ref)

    Tt, B, D = xf_ref.shape
    H2 = out_ref.shape[-1]

    # Hoisted input projection: one big GEMM per direction for the whole tile.
    xf = xf_ref[...].reshape(Tt * B, D)
    xb = xb_ref[...].reshape(Tt * B, D)
    pf = jnp.dot(xf, wih_f_ref[...], preferred_element_type=jnp.float32)
    pb = jnp.dot(xb, wih_b_ref[...], preferred_element_type=jnp.float32)
    proj = jnp.concatenate([pf, pb], axis=-1) + b_ref[...]
    proj_ref[...] = proj.reshape(Tt, B, H2)

    whh = whh_ref[...]  # (2H, 2H) block-diagonal, contraction layout

    def step(t, h):
        m_t = mask_ref[pl.ds(t, 1)][0]                 # (B, 1)
        p_t = proj_ref[pl.ds(t, 1)][0]                 # (B, 2H)
        pre = p_t + jnp.dot(h, whh, preferred_element_type=jnp.float32)
        h_new = jnp.tanh(pre)
        h = jnp.where(m_t > 0.5, h_new, h)             # mask carry-over
        out_ref[pl.ds(t, 1)] = h[None].astype(out_ref.dtype)
        return h

    h_ref[...] = lax.fori_loop(0, Tt, step, h_ref[...], unroll=True)


@functools.partial(jax.jit, static_argnames=("t_tile",))
def bidirectional_rnn(x_fwd, x_bwd, mask, params, *, t_tile=8):
    """x_fwd, x_bwd: (B, T, D) float32; mask: (B, T) float (0/1).
    Returns (B, T, 2*H) = concat(forward RNN output, backward RNN output)."""
    B, T, D = x_fwd.shape
    H = params["w_hh_f"].shape[0]
    H2 = 2 * H

    # Alignment padding: batch -> multiple of 8 (sublanes), T -> multiple of
    # the time tile. Padded rows/steps get mask 0 (hidden stays 0 / carried).
    B_pad = -(-B // 8) * 8
    T_pad = -(-T // t_tile) * t_tile

    def to_time_major(x):
        x = jnp.transpose(x, (1, 0, 2))                       # (T, B, D)
        return jnp.pad(x, ((0, T_pad - T), (0, B_pad - B), (0, 0)))

    xf = to_time_major(x_fwd)
    xb = to_time_major(x_bwd)
    m = jnp.pad(mask.astype(jnp.float32).T[:, :, None],
                ((0, T_pad - T), (0, B_pad - B), (0, 0)))     # (T_pad, B_pad, 1)

    # One-time (per call) param prep: contraction layout + fused direction.
    wih_f = params["w_ih_f"].T                                # (D, H)
    wih_b = params["w_ih_b"].T                                # (D, H)
    whh_blk = jnp.zeros((H2, H2), jnp.float32)
    whh_blk = whh_blk.at[:H, :H].set(params["w_hh_f"].T)
    whh_blk = whh_blk.at[H:, H:].set(params["w_hh_b"].T)      # (2H, 2H)
    bias = jnp.concatenate([params["b_ih_f"] + params["b_hh_f"],
                            params["b_ih_b"] + params["b_hh_b"]])[None, :]

    grid = (T_pad // t_tile,)
    out = pl.pallas_call(
        _birnn_kernel,
        out_shape=jax.ShapeDtypeStruct((T_pad, B_pad, H2), jnp.float32),
        grid=grid,
        in_specs=[
            pl.BlockSpec((t_tile, B_pad, D), lambda t: (t, 0, 0)),   # x_fwd
            pl.BlockSpec((t_tile, B_pad, D), lambda t: (t, 0, 0)),   # x_bwd
            pl.BlockSpec((t_tile, B_pad, 1), lambda t: (t, 0, 0)),   # mask
            pl.BlockSpec((D, H), lambda t: (0, 0)),                  # W_ih_f^T
            pl.BlockSpec((D, H), lambda t: (0, 0)),                  # W_ih_b^T
            pl.BlockSpec((H2, H2), lambda t: (0, 0)),                # W_hh blkdiag
            pl.BlockSpec((1, H2), lambda t: (0, 0)),                 # bias
        ],
        out_specs=pl.BlockSpec((t_tile, B_pad, H2), lambda t: (t, 0, 0)),
        scratch_shapes=[
            pltpu.VMEM((B_pad, H2), jnp.float32),           # hidden carry
            pltpu.VMEM((t_tile, B_pad, H2), jnp.float32),   # hoisted projection
        ],
        compiler_params=pltpu.CompilerParams(
            dimension_semantics=("arbitrary",),   # recurrence over time tiles
            vmem_limit_bytes=32 * 1024 * 1024,
        ),
    )(xf, xb, m, wih_f, wih_b, whh_blk, bias)

    out = out[:T, :B]                            # strip padding
    return jnp.transpose(out, (1, 0, 2))         # (B, T, 2H)


def _rnn_ref(x, mask, w_ih, w_hh, b_ih, b_hh):
    """Pure-JAX reference of one masked Elman RNN (batch-first)."""
    B, T, _ = x.shape
    H = w_hh.shape[0]

    def step(h, inp):
        x_t, m_t = inp
        h_new = jnp.tanh(x_t @ w_ih.T + b_ih + h @ w_hh.T + b_hh)
        h = m_t[:, None] * h_new + (1.0 - m_t[:, None]) * h
        return h, h

    xs = (jnp.transpose(x, (1, 0, 2)), mask.T)
    _, hs = lax.scan(step, jnp.zeros((B, H), jnp.float32), xs)
    return jnp.transpose(hs, (1, 0, 2))


if __name__ == "__main__":
    B, T, D, H = 2, 8, 32, 32
    key = jax.random.PRNGKey(0)
    ks = jax.random.split(key, 10)

    scale = 1.0 / jnp.sqrt(H)
    params = {
        "w_ih_f": jax.random.uniform(ks[0], (H, D), jnp.float32, -scale, scale),
        "w_hh_f": jax.random.uniform(ks[1], (H, H), jnp.float32, -scale, scale),
        "b_ih_f": jax.random.uniform(ks[2], (H,), jnp.float32, -scale, scale),
        "b_hh_f": jax.random.uniform(ks[3], (H,), jnp.float32, -scale, scale),
        "w_ih_b": jax.random.uniform(ks[4], (H, D), jnp.float32, -scale, scale),
        "w_hh_b": jax.random.uniform(ks[5], (H, H), jnp.float32, -scale, scale),
        "b_ih_b": jax.random.uniform(ks[6], (H,), jnp.float32, -scale, scale),
        "b_hh_b": jax.random.uniform(ks[7], (H,), jnp.float32, -scale, scale),
    }

    # embedded = (forward stream, backward stream); mask broadcast to both.
    x_fwd = jax.random.normal(ks[8], (B, T, D), jnp.float32)
    x_bwd = jax.random.normal(ks[9], (B, T, D), jnp.float32)
    lengths = jnp.array([T, T - 2])
    mask = (jnp.arange(T)[None, :] < lengths[:, None]).astype(jnp.float32)

    out = bidirectional_rnn(x_fwd, x_bwd, mask, params)
    out = jax.block_until_ready(out)
    assert out.shape == (B, T, 2 * H), out.shape

    # Correctness check against a pure-JAX reference.
    ref_f = _rnn_ref(x_fwd, mask, params["w_ih_f"], params["w_hh_f"],
                     params["b_ih_f"], params["b_hh_f"])
    ref_b = _rnn_ref(x_bwd, mask, params["w_ih_b"], params["w_hh_b"],
                     params["b_ih_b"], params["b_hh_b"])
    ref = jnp.concatenate([ref_f, ref_b], axis=-1)
    assert jnp.allclose(out, ref, atol=1e-2, rtol=1e-2), float(
        jnp.max(jnp.abs(out - ref)))

    # TODO(synk): return_hidden=True path and get_all_layer_output (multi-layer
    # stacking) of the abstract module are not kernelized here.
    print("KERNEL_OK")
</pallas_src>

<mosaic_0001>
module attributes {stable_mosaic.version = 11 : i64} {
  func.func @_birnn_kernel(%arg0: i32, %arg1: memref<8x8x32xf32, #tpu.memory_space<vmem>>, %arg2: memref<8x8x32xf32, #tpu.memory_space<vmem>>, %arg3: memref<8x8x1xf32, #tpu.memory_space<vmem>>, %arg4: memref<32x32xf32, #tpu.memory_space<vmem>>, %arg5: memref<32x32xf32, #tpu.memory_space<vmem>>, %arg6: memref<64x64xf32, #tpu.memory_space<vmem>>, %arg7: memref<1x64xf32, #tpu.memory_space<vmem>>, %arg8: memref<8x8x64xf32, #tpu.memory_space<vmem>>, %arg9: memref<8x64xf32, #tpu.memory_space<vmem>>, %arg10: memref<8x8x64xf32, #tpu.memory_space<vmem>>) attributes {dimension_semantics = [#tpu.dimension_semantics<arbitrary>], iteration_bounds = array<i64: 1>, scalar_prefetch = 0 : i64, scratch_operands = 2 : i64, tpu.core_type = #tpu.core_type<tc>, window_params = [{transform_indices = @transform_0, window_bounds = array<i64: 8, 8, 32>}, {transform_indices = @transform_1, window_bounds = array<i64: 8, 8, 32>}, {transform_indices = @transform_2, window_bounds = array<i64: 8, 8, 1>}, {pipeline_mode = #tpu.pipeline_mode<synchronous>, transform_indices = @transform_3, window_bounds = array<i64: 32, 32>}, {pipeline_mode = #tpu.pipeline_mode<synchronous>, transform_indices = @transform_4, window_bounds = array<i64: 32, 32>}, {pipeline_mode = #tpu.pipeline_mode<synchronous>, transform_indices = @transform_5, window_bounds = array<i64: 64, 64>}, {pipeline_mode = #tpu.pipeline_mode<synchronous>, transform_indices = @transform_6, window_bounds = array<i64: 1, 64>}, {transform_indices = @transform_7, window_bounds = array<i64: 8, 8, 64>}]} {
    %c0_i32 = arith.constant 0 : i32
    %0 = arith.cmpi eq, %arg0, %c0_i32 : i32
    %1 = arith.extui %0 : i1 to i32
    %c0_i32_0 = arith.constant 0 : i32
    %2 = arith.cmpi ne, %1, %c0_i32_0 : i32
    scf.if %2 {
      %cst_87 = arith.constant 0.000000e+00 : f32
      %156 = vector.broadcast %cst_87 : f32 to vector<8x64xf32>
      %c0_88 = arith.constant 0 : index
      %c0_89 = arith.constant 0 : index
      %157 = vector.load %arg9[%c0_88, %c0_89] : memref<8x64xf32, #tpu.memory_space<vmem>>, vector<8x64xf32>
      tpu.vector_store %arg9[%c0_88, %c0_89], %156 {strides = array<i32>} : memref<8x64xf32, #tpu.memory_space<vmem>>, vector<8x64xf32>,
    } else {
    }
    %c0 = arith.constant 0 : index
    %c0_1 = arith.constant 0 : index
    %c0_2 = arith.constant 0 : index
    %3 = vector.load %arg1[%c0, %c0_1, %c0_2] : memref<8x8x32xf32, #tpu.memory_space<vmem>>, vector<8x8x32xf32>
    %4 = vector.shape_cast %3 : vector<8x8x32xf32> to vector<64x32xf32>
    %c0_3 = arith.constant 0 : index
    %c0_4 = arith.constant 0 : index
    %c0_5 = arith.constant 0 : index
    %5 = vector.load %arg2[%c0_3, %c0_4, %c0_5] : memref<8x8x32xf32, #tpu.memory_space<vmem>>, vector<8x8x32xf32>
    %6 = vector.shape_cast %5 : vector<8x8x32xf32> to vector<64x32xf32>
    %c0_6 = arith.constant 0 : index
    %c0_7 = arith.constant 0 : index
    %7 = vector.load %arg4[%c0_6, %c0_7] : memref<32x32xf32, #tpu.memory_space<vmem>>, vector<32x32xf32>
    %cst = arith.constant dense<0.000000e+00> : vector<64x32xf32>
    %8 = tpu.matmul %4, %7, %cst {dimension_numbers = #tpu.dot_dimension_numbers<[1], [0], [0], [1], [0, 0, 1, 1], [], []>} : vector<64x32xf32>, vector<32x32xf32>, vector<64x32xf32> -> vector<64x32xf32>
    %c0_8 = arith.constant 0 : index
    %c0_9 = arith.constant 0 : index
    %9 = vector.load %arg5[%c0_8, %c0_9] : memref<32x32xf32, #tpu.memory_space<vmem>>, vector<32x32xf32>
    %cst_10 = arith.constant dense<0.000000e+00> : vector<64x32xf32>
    %10 = tpu.matmul %6, %9, %cst_10 {dimension_numbers = #tpu.dot_dimension_numbers<[1], [0], [0], [1], [0, 0, 1, 1], [], []>} : vector<64x32xf32>, vector<32x32xf32>, vector<64x32xf32> -> vector<64x32xf32>
    %11 = tpu.concatenate %8, %10 in 1 : vector<64x32xf32>, vector<64x32xf32> -> vector<64x64xf32>
    %c0_11 = arith.constant 0 : index
    %c0_12 = arith.constant 0 : index
    %12 = vector.load %arg7[%c0_11, %c0_12] : memref<1x64xf32, #tpu.memory_space<vmem>>, vector<1x64xf32>
    %13 = vector.broadcast %12 : vector<1x64xf32> to vector<64x64xf32>
    %14 = arith.addf %11, %13 : vector<64x64xf32>
    %15 = vector.shape_cast %14 : vector<64x64xf32> to vector<8x8x64xf32>
    %c0_13 = arith.constant 0 : index
    %c0_14 = arith.constant 0 : index
    %c0_15 = arith.constant 0 : index
    %16 = vector.load %arg10[%c0_13, %c0_14, %c0_15] : memref<8x8x64xf32, #tpu.memory_space<vmem>>, vector<8x8x64xf32>
    tpu.vector_store %arg10[%c0_13, %c0_14, %c0_15], %15 {strides = array<i32>} : memref<8x8x64xf32, #tpu.memory_space<vmem>>, vector<8x8x64xf32>,
    %c0_16 = arith.constant 0 : index
    %c0_17 = arith.constant 0 : index
    %17 = vector.load %arg6[%c0_16, %c0_17] : memref<64x64xf32, #tpu.memory_space<vmem>>, vector<64x64xf32>
    %c0_18 = arith.constant 0 : index
    %c0_19 = arith.constant 0 : index
    %18 = vector.load %arg9[%c0_18, %c0_19] : memref<8x64xf32, #tpu.memory_space<vmem>>, vector<8x64xf32>
    %c0_i32_20 = arith.constant 0 : i32
    %19 = arith.index_cast %c0_i32_20 : i32 to index
    %c0_21 = arith.constant 0 : index
    %c0_22 = arith.constant 0 : index
    %20 = vector.load %arg3[%19, %c0_21, %c0_22] : memref<8x8x1xf32, #tpu.memory_space<vmem>>, vector<1x8x1xf32>
    %21 = vector.shape_cast %20 : vector<1x8x1xf32> to vector<8x1xf32>
    %22 = arith.index_cast %c0_i32_20 : i32 to index
    %c0_23 = arith.constant 0 : index
    %c0_24 = arith.constant 0 : index
    %23 = vector.load %arg10[%22, %c0_23, %c0_24] : memref<8x8x64xf32, #tpu.memory_space<vmem>>, vector<1x8x64xf32>
    %24 = vector.shape_cast %23 : vector<1x8x64xf32> to vector<8x64xf32>
    %cst_25 = arith.constant dense<0.000000e+00> : vector<8x64xf32>
    %25 = tpu.matmul %18, %17, %cst_25 {dimension_numbers = #tpu.dot_dimension_numbers<[1], [0], [0], [1], [0, 0, 1, 1], [], []>} : vector<8x64xf32>, vector<64x64xf32>, vector<8x64xf32> -> vector<8x64xf32>
    %26 = arith.addf %24, %25 : vector<8x64xf32>
    %27 = math.tanh %26 : vector<8x64xf32>
    %cst_26 = arith.constant 5.000000e-01 : f32
    %28 = vector.broadcast %cst_26 : f32 to vector<8x1xf32>
    %29 = arith.cmpf ogt, %21, %28 : vector<8x1xf32>
    %30 = vector.shape_cast %29 : vector<8x1xi1> to vector<8x1xi1>
    %31 = vector.broadcast %30 : vector<8x1xi1> to vector<8x64xi1>
    %32 = arith.select %31, %27, %18 : vector<8x64xi1>, vector<8x64xf32>
    %33 = vector.shape_cast %32 : vector<8x64xf32> to vector<1x8x64xf32>
    %34 = arith.index_cast %c0_i32_20 : i32 to index
    %c0_27 = arith.constant 0 : index
    %c0_28 = arith.constant 0 : index
    %35 = vector.load %arg8[%34, %c0_27, %c0_28] : memref<8x8x64xf32, #tpu.memory_space<vmem>>, vector<1x8x64xf32>
    tpu.vector_store %arg8[%34, %c0_27, %c0_28], %33 {strides = array<i32>} : memref<8x8x64xf32, #tpu.memory_space<vmem>>, vector<1x8x64xf32>,
    %c1_i32 = arith.constant 1 : i32
    %36 = arith.index_cast %c1_i32 : i32 to index
    %c0_29 = arith.constant 0 : index
    %c0_30 = arith.constant 0 : index
    %37 = vector.load %arg3[%36, %c0_29, %c0_30] : memref<8x8x1xf32, #tpu.memory_space<vmem>>, vector<1x8x1xf32>
    %38 = vector.shape_cast %37 : vector<1x8x1xf32> to vector<8x1xf32>
    %39 = arith.index_cast %c1_i32 : i32 to index
    %c0_31 = arith.constant 0 : index
    %c0_32 = arith.constant 0 : index
    %40 = vector.load %arg10[%39, %c0_31, %c0_32] : memref<8x8x64xf32, #tpu.memory_space<vmem>>, vector<1x8x64xf32>
    %41 = vector.shape_cast %40 : vector<1x8x64xf32> to vector<8x64xf32>
    %cst_33 = arith.constant dense<0.000000e+00> : vector<8x64xf32>
    %42 = tpu.matmul %32, %17, %cst_33 {dimension_numbers = #tpu.dot_dimension_numbers<[1], [0], [0], [1], [0, 0, 1, 1], [], []>} : vector<8x64xf32>, vector<64x64xf32>, vector<8x64xf32> -> vector<8x64xf32>
    %43 = arith.addf %41, %42 : vector<8x64xf32>
    %44 = math.tanh %43 : vector<8x64xf32>
    %cst_34 = arith.constant 5.000000e-01 : f32
    %45 = vector.broadcast %cst_34 : f32 to vector<8x1xf32>
    %46 = arith.cmpf ogt, %38, %45 : vector<8x1xf32>
    %47 = vector.shape_cast %46 : vector<8x1xi1> to vector<8x1xi1>
    %48 = vector.broadcast %47 : vector<8x1xi1> to vector<8x64xi1>
    %49 = arith.select %48, %44, %32 : vector<8x64xi1>, vector<8x64xf32>
    %50 = vector.shape_cast %49 : vector<8x64xf32> to vector<1x8x64xf32>
    %51 = arith.index_cast %c1_i32 : i32 to index
    %c0_35 = arith.constant 0 : index
    %c0_36 = arith.constant 0 : index
    %52 = vector.load %arg8[%51, %c0_35, %c0_36] : memref<8x8x64xf32, #tpu.memory_space<vmem>>, vector<1x8x64xf32>
    tpu.vector_store %arg8[%51, %c0_35, %c0_36], %50 {strides = array<i32>} : memref<8x8x64xf32, #tpu.memory_space<vmem>>, vector<1x8x64xf32>,
    %c2_i32 = arith.constant 2 : i32
    %53 = arith.index_cast %c2_i32 : i32 to index
    %c0_37 = arith.constant 0 : index
    %c0_38 = arith.constant 0 : index
    %54 = vector.load %arg3[%53, %c0_37, %c0_38] : memref<8x8x1xf32, #tpu.memory_space<vmem>>, vector<1x8x1xf32>
    %55 = vector.shape_cast %54 : vector<1x8x1xf32> to vector<8x1xf32>
    %56 = arith.index_cast %c2_i32 : i32 to index
    %c0_39 = arith.constant 0 : index
    %c0_40 = arith.constant 0 : index
    %57 = vector.load %arg10[%56, %c0_39, %c0_40] : memref<8x8x64xf32, #tpu.memory_space<vmem>>, vector<1x8x64xf32>
    %58 = vector.shape_cast %57 : vector<1x8x64xf32> to vector<8x64xf32>
    %cst_41 = arith.constant dense<0.000000e+00> : vector<8x64xf32>
    %59 = tpu.matmul %49, %17, %cst_41 {dimension_numbers = #tpu.dot_dimension_numbers<[1], [0], [0], [1], [0, 0, 1, 1], [], []>} : vector<8x64xf32>, vector<64x64xf32>, vector<8x64xf32> -> vector<8x64xf32>
    %60 = arith.addf %58, %59 : vector<8x64xf32>
    %61 = math.tanh %60 : vector<8x64xf32>
    %cst_42 = arith.constant 5.000000e-01 : f32
    %62 = vector.broadcast %cst_42 : f32 to vector<8x1xf32>
    %63 = arith.cmpf ogt, %55, %62 : vector<8x1xf32>
    %64 = vector.shape_cast %63 : vector<8x1xi1> to vector<8x1xi1>
    %65 = vector.broadcast %64 : vector<8x1xi1> to vector<8x64xi1>
    %66 = arith.select %65, %61, %49 : vector<8x64xi1>, vector<8x64xf32>
    %67 = vector.shape_cast %66 : vector<8x64xf32> to vector<1x8x64xf32>
    %68 = arith.index_cast %c2_i32 : i32 to index
    %c0_43 = arith.constant 0 : index
    %c0_44 = arith.constant 0 : index
    %69 = vector.load %arg8[%68, %c0_43, %c0_44] : memref<8x8x64xf32, #tpu.memory_space<vmem>>, vector<1x8x64xf32>
    tpu.vector_store %arg8[%68, %c0_43, %c0_44], %67 {strides = array<i32>} : memref<8x8x64xf32, #tpu.memory_space<vmem>>, vector<1x8x64xf32>,
    %c3_i32 = arith.constant 3 : i32
    %70 = arith.index_cast %c3_i32 : i32 to index
    %c0_45 = arith.constant 0 : index
    %c0_46 = arith.constant 0 : index
    %71 = vector.load %arg3[%70, %c0_45, %c0_46] : memref<8x8x1xf32, #tpu.memory_space<vmem>>, vector<1x8x1xf32>
    %72 = vector.shape_cast %71 : vector<1x8x1xf32> to vector<8x1xf32>
    %73 = arith.index_cast %c3_i32 : i32 to index
    %c0_47 = arith.constant 0 : index
    %c0_48 = arith.constant 0 : index
    %74 = vector.load %arg10[%73, %c0_47, %c0_48] : memref<8x8x64xf32, #tpu.memory_space<vmem>>, vector<1x8x64xf32>
    %75 = vector.shape_cast %74 : vector<1x8x64xf32> to vector<8x64xf32>
    %cst_49 = arith.constant dense<0.000000e+00> : vector<8x64xf32>
    %76 = tpu.matmul %66, %17, %cst_49 {dimension_numbers = #tpu.dot_dimension_numbers<[1], [0], [0], [1], [0, 0, 1, 1], [], []>} : vector<8x64xf32>, vector<64x64xf32>, vector<8x64xf32> -> vector<8x64xf32>
    %77 = arith.addf %75, %76 : vector<8x64xf32>
    %78 = math.tanh %77 : vector<8x64xf32>
    %cst_50 = arith.constant 5.000000e-01 : f32
    %79 = vector.broadcast %cst_50 : f32 to vector<8x1xf32>
    %80 = arith.cmpf ogt, %72, %79 : vector<8x1xf32>
    %81 = vector.shape_cast %80 : vector<8x1xi1> to vector<8x1xi1>
    %82 = vector.broadcast %81 : vector<8x1xi1> to vector<8x64xi1>
    %83 = arith.select %82, %78, %66 : vector<8x64xi1>, vector<8x64xf32>
    %84 = vector.shape_cast %83 : vector<8x64xf32> to vector<1x8x64xf32>
    %85 = arith.index_cast %c3_i32 : i32 to index
    %c0_51 = arith.constant 0 : index
    %c0_52 = arith.constant 0 : index
    %86 = vector.load %arg8[%85, %c0_51, %c0_52] : memref<8x8x64xf32, #tpu.memory_space<vmem>>, vector<1x8x64xf32>
    tpu.vector_store %arg8[%85, %c0_51, %c0_52], %84 {strides = array<i32>} : memref<8x8x64xf32, #tpu.memory_space<vmem>>, vector<1x8x64xf32>,
    %c4_i32 = arith.constant 4 : i32
    %87 = arith.index_cast %c4_i32 : i32 to index
    %c0_53 = arith.constant 0 : index
    %c0_54 = arith.constant 0 : index
    %88 = vector.load %arg3[%87, %c0_53, %c0_54] : memref<8x8x1xf32, #tpu.memory_space<vmem>>, vector<1x8x1xf32>
    %89 = vector.shape_cast %88 : vector<1x8x1xf32> to vector<8x1xf32>
    %90 = arith.index_cast %c4_i32 : i32 to index
    %c0_55 = arith.constant 0 : index
    %c0_56 = arith.constant 0 : index
    %91 = vector.load %arg10[%90, %c0_55, %c0_56] : memref<8x8x64xf32, #tpu.memory_space<vmem>>, vector<1x8x64xf32>
    %92 = vector.shape_cast %91 : vector<1x8x64xf32> to vector<8x64xf32>
    %cst_57 = arith.constant dense<0.000000e+00> : vector<8x64xf32>
    %93 = tpu.matmul %83, %17, %cst_57 {dimension_numbers = #tpu.dot_dimension_numbers<[1], [0], [0], [1], [0, 0, 1, 1], [], []>} : vector<8x64xf32>, vector<64x64xf32>, vector<8x64xf32> -> vector<8x64xf32>
    %94 = arith.addf %92, %93 : vector<8x64xf32>
    %95 = math.tanh %94 : vector<8x64xf32>
    %cst_58 = arith.constant 5.000000e-01 : f32
    %96 = vector.broadcast %cst_58 : f32 to vector<8x1xf32>
    %97 = arith.cmpf ogt, %89, %96 : vector<8x1xf32>
    %98 = vector.shape_cast %97 : vector<8x1xi1> to vector<8x1xi1>
    %99 = vector.broadcast %98 : vector<8x1xi1> to vector<8x64xi1>
    %100 = arith.select %99, %95, %83 : vector<8x64xi1>, vector<8x64xf32>
    %101 = vector.shape_cast %100 : vector<8x64xf32> to vector<1x8x64xf32>
    %102 = arith.index_cast %c4_i32 : i32 to index
    %c0_59 = arith.constant 0 : index
    %c0_60 = arith.constant 0 : index
    %103 = vector.load %arg8[%102, %c0_59, %c0_60] : memref<8x8x64xf32, #tpu.memory_space<vmem>>, vector<1x8x64xf32>
    tpu.vector_store %arg8[%102, %c0_59, %c0_60], %101 {strides = array<i32>} : memref<8x8x64xf32, #tpu.memory_space<vmem>>, vector<1x8x64xf32>,
    %c5_i32 = arith.constant 5 : i32
    %104 = arith.index_cast %c5_i32 : i32 to index
    %c0_61 = arith.constant 0 : index
    %c0_62 = arith.constant 0 : index
    %105 = vector.load %arg3[%104, %c0_61, %c0_62] : memref<8x8x1xf32, #tpu.memory_space<vmem>>, vector<1x8x1xf32>
    %106 = vector.shape_cast %105 : vector<1x8x1xf32> to vector<8x1xf32>
    %107 = arith.index_cast %c5_i32 : i32 to index
    %c0_63 = arith.constant 0 : index
    %c0_64 = arith.constant 0 : index
    %108 = vector.load %arg10[%107, %c0_63, %c0_64] : memref<8x8x64xf32, #tpu.memory_space<vmem>>, vector<1x8x64xf32>
    %109 = vector.shape_cast %108 : vector<1x8x64xf32> to vector<8x64xf32>
    %cst_65 = arith.constant dense<0.000000e+00> : vector<8x64xf32>
    %110 = tpu.matmul %100, %17, %cst_65 {dimension_numbers = #tpu.dot_dimension_numbers<[1], [0], [0], [1], [0, 0, 1, 1], [], []>} : vector<8x64xf32>, vector<64x64xf32>, vector<8x64xf32> -> vector<8x64xf32>
    %111 = arith.addf %109, %110 : vector<8x64xf32>
    %112 = math.tanh %111 : vector<8x64xf32>
    %cst_66 = arith.constant 5.000000e-01 : f32
    %113 = vector.broadcast %cst_66 : f32 to vector<8x1xf32>
    %114 = arith.cmpf ogt, %106, %113 : vector<8x1xf32>
    %115 = vector.shape_cast %114 : vector<8x1xi1> to vector<8x1xi1>
    %116 = vector.broadcast %115 : vector<8x1xi1> to vector<8x64xi1>
    %117 = arith.select %116, %112, %100 : vector<8x64xi1>, vector<8x64xf32>
    %118 = vector.shape_cast %117 : vector<8x64xf32> to vector<1x8x64xf32>
    %119 = arith.index_cast %c5_i32 : i32 to index
    %c0_67 = arith.constant 0 : index
    %c0_68 = arith.constant 0 : index
    %120 = vector.load %arg8[%119, %c0_67, %c0_68] : memref<8x8x64xf32, #tpu.memory_space<vmem>>, vector<1x8x64xf32>
    tpu.vector_store %arg8[%119, %c0_67, %c0_68], %118 {strides = array<i32>} : memref<8x8x64xf32, #tpu.memory_space<vmem>>, vector<1x8x64xf32>,
    %c6_i32 = arith.constant 6 : i32
    %121 = arith.index_cast %c6_i32 : i32 to index
    %c0_69 = arith.constant 0 : index
    %c0_70 = arith.constant 0 : index
    %122 = vector.load %arg3[%121, %c0_69, %c0_70] : memref<8x8x1xf32, #tpu.memory_space<vmem>>, vector<1x8x1xf32>
    %123 = vector.shape_cast %122 : vector<1x8x1xf32> to vector<8x1xf32>
    %124 = arith.index_cast %c6_i32 : i32 to index
    %c0_71 = arith.constant 0 : index
    %c0_72 = arith.constant 0 : index
    %125 = vector.load %arg10[%124, %c0_71, %c0_72] : memref<8x8x64xf32, #tpu.memory_space<vmem>>, vector<1x8x64xf32>
    %126 = vector.shape_cast %125 : vector<1x8x64xf32> to vector<8x64xf32>
    %cst_73 = arith.constant dense<0.000000e+00> : vector<8x64xf32>
    %127 = tpu.matmul %117, %17, %cst_73 {dimension_numbers = #tpu.dot_dimension_numbers<[1], [0], [0], [1], [0, 0, 1, 1], [], []>} : vector<8x64xf32>, vector<64x64xf32>, vector<8x64xf32> -> vector<8x64xf32>
    %128 = arith.addf %126, %127 : vector<8x64xf32>
    %129 = math.tanh %128 : vector<8x64xf32>
    %cst_74 = arith.constant 5.000000e-01 : f32
    %130 = vector.broadcast %cst_74 : f32 to vector<8x1xf32>
    %131 = arith.cmpf ogt, %123, %130 : vector<8x1xf32>
    %132 = vector.shape_cast %131 : vector<8x1xi1> to vector<8x1xi1>
    %133 = vector.broadcast %132 : vector<8x1xi1> to vector<8x64xi1>
    %134 = arith.select %133, %129, %117 : vector<8x64xi1>, vector<8x64xf32>
    %135 = vector.shape_cast %134 : vector<8x64xf32> to vector<1x8x64xf32>
    %136 = arith.index_cast %c6_i32 : i32 to index
    %c0_75 = arith.constant 0 : index
    %c0_76 = arith.constant 0 : index
    %137 = vector.load %arg8[%136, %c0_75, %c0_76] : memref<8x8x64xf32, #tpu.memory_space<vmem>>, vector<1x8x64xf32>
    tpu.vector_store %arg8[%136, %c0_75, %c0_76], %135 {strides = array<i32>} : memref<8x8x64xf32, #tpu.memory_space<vmem>>, vector<1x8x64xf32>,
    %c7_i32 = arith.constant 7 : i32
    %138 = arith.index_cast %c7_i32 : i32 to index
    %c0_77 = arith.constant 0 : index
    %c0_78 = arith.constant 0 : index
    %139 = vector.load %arg3[%138, %c0_77, %c0_78] : memref<8x8x1xf32, #tpu.memory_space<vmem>>, vector<1x8x1xf32>
    %140 = vector.shape_cast %139 : vector<1x8x1xf32> to vector<8x1xf32>
    %141 = arith.index_cast %c7_i32 : i32 to index
    %c0_79 = arith.constant 0 : index
    %c0_80 = arith.constant 0 : index
    %142 = vector.load %arg10[%141, %c0_79, %c0_80] : memref<8x8x64xf32, #tpu.memory_space<vmem>>, vector<1x8x64xf32>
    %143 = vector.shape_cast %142 : vector<1x8x64xf32> to vector<8x64xf32>
    %cst_81 = arith.constant dense<0.000000e+00> : vector<8x64xf32>
    %144 = tpu.matmul %134, %17, %cst_81 {dimension_numbers = #tpu.dot_dimension_numbers<[1], [0], [0], [1], [0, 0, 1, 1], [], []>} : vector<8x64xf32>, vector<64x64xf32>, vector<8x64xf32> -> vector<8x64xf32>
    %145 = arith.addf %143, %144 : vector<8x64xf32>
    %146 = math.tanh %145 : vector<8x64xf32>
    %cst_82 = arith.constant 5.000000e-01 : f32
    %147 = vector.broadcast %cst_82 : f32 to vector<8x1xf32>
    %148 = arith.cmpf ogt, %140, %147 : vector<8x1xf32>
    %149 = vector.shape_cast %148 : vector<8x1xi1> to vector<8x1xi1>
    %150 = vector.broadcast %149 : vector<8x1xi1> to vector<8x64xi1>
    %151 = arith.select %150, %146, %134 : vector<8x64xi1>, vector<8x64xf32>
    %152 = vector.shape_cast %151 : vector<8x64xf32> to vector<1x8x64xf32>
    %153 = arith.index_cast %c7_i32 : i32 to index
    %c0_83 = arith.constant 0 : index
    %c0_84 = arith.constant 0 : index
    %154 = vector.load %arg8[%153, %c0_83, %c0_84] : memref<8x8x64xf32, #tpu.memory_space<vmem>>, vector<1x8x64xf32>
    tpu.vector_store %arg8[%153, %c0_83, %c0_84], %152 {strides = array<i32>} : memref<8x8x64xf32, #tpu.memory_space<vmem>>, vector<1x8x64xf32>,
    %c8_i32 = arith.constant 8 : i32
    %c0_85 = arith.constant 0 : index
    %c0_86 = arith.constant 0 : index
    %155 = vector.load %arg9[%c0_85, %c0_86] : memref<8x64xf32, #tpu.memory_space<vmem>>, vector<8x64xf32>
    tpu.vector_store %arg9[%c0_85, %c0_86], %151 {strides = array<i32>} : memref<8x64xf32, #tpu.memory_space<vmem>>, vector<8x64xf32>,
    return
  }
  func.func @transform_0(%arg0: i32) -> (i32, i32, i32) {
    %c0_i32 = arith.constant 0 : i32
    %c0_i32_0 = arith.constant 0 : i32
    %c0_i32_1 = arith.constant 0 : i32
    return %arg0, %c0_i32, %c0_i32_0 : i32, i32, i32
  }
  func.func @transform_1(%arg0: i32) -> (i32, i32, i32) {
    %c0_i32 = arith.constant 0 : i32
    %c0_i32_0 = arith.constant 0 : i32
    %c0_i32_1 = arith.constant 0 : i32
    return %arg0, %c0_i32, %c0_i32_0 : i32, i32, i32
  }
  func.func @transform_2(%arg0: i32) -> (i32, i32, i32) {
    %c0_i32 = arith.constant 0 : i32
    %c0_i32_0 = arith.constant 0 : i32
    %c0_i32_1 = arith.constant 0 : i32
    return %arg0, %c0_i32, %c0_i32_0 : i32, i32, i32
  }
  func.func @transform_3(%arg0: i32) -> (i32, i32) {
    %c0_i32 = arith.constant 0 : i32
    %c0_i32_0 = arith.constant 0 : i32
    %c0_i32_1 = arith.constant 0 : i32
    return %c0_i32, %c0_i32_0 : i32, i32
  }
  func.func @transform_4(%arg0: i32) -> (i32, i32) {
    %c0_i32 = arith.constant 0 : i32
    %c0_i32_0 = arith.constant 0 : i32
    %c0_i32_1 = arith.constant 0 : i32
    return %c0_i32, %c0_i32_0 : i32, i32
  }
  func.func @transform_5(%arg0: i32) -> (i32, i32) {
    %c0_i32 = arith.constant 0 : i32
    %c0_i32_0 = arith.constant 0 : i32
    %c0_i32_1 = arith.constant 0 : i32
    return %c0_i32, %c0_i32_0 : i32, i32
  }
  func.func @transform_6(%arg0: i32) -> (i32, i32) {
    %c0_i32 = arith.constant 0 : i32
    %c0_i32_0 = arith.constant 0 : i32
    %c0_i32_1 = arith.constant 0 : i32
    return %c0_i32, %c0_i32_0 : i32, i32
  }
  func.func @transform_7(%arg0: i32) -> (i32, i32, i32) {
    %c0_i32 = arith.constant 0 : i32
    %c0_i32_0 = arith.constant 0 : i32
    %c0_i32_1 = arith.constant 0 : i32
    return %arg0, %c0_i32, %c0_i32_0 : i32, i32, i32
  }
}

</mosaic_0001>

<llo_original>
// kernel: bidirectional_rnn.1
$region0: #{bidirectional_rnn.1}
  #allocation0 [shape = 'u32[]', space=smem, size = 0x4, offset = 0x4, fixed_abs, tag = 'smem constant byte address 0x4 - core index']
  #allocation1 [shape = 'u32[144,128]{1,0:T(1,128)}', space=vmem, size = 0x12000, scoped, tag = 'internal scratch']
  #allocation2 [shape = 'f32[8,64]{1,0:T(8,128)}', space=vmem, size = 0x1000, scoped, tag = 'scratch operand']
  #allocation3 [shape = 'f32[8,8,64]{2,1,0:T(8,128)}', space=vmem, size = 0x8000, scoped, tag = 'scratch operand']
  %s0 = inlined_call_operand.vmem [shape: f32[8,8,32], index: 0, kind: input, shape index: {}]
  %s1 = inlined_call_operand.vmem [shape: f32[8,8,32], index: 1, kind: input, shape index: {}]
  %s2 = inlined_call_operand.vmem [shape: f32[8,8,1], index: 2, kind: input, shape index: {}]
  %s3 = inlined_call_operand.vmem [shape: f32[32,32], index: 3, kind: input, shape index: {}]
  %s4 = inlined_call_operand.vmem [shape: f32[32,32], index: 4, kind: input, shape index: {}]
  %s5 = inlined_call_operand.vmem [shape: f32[64,64], index: 5, kind: input, shape index: {}]
  %s6 = inlined_call_operand.vmem [shape: f32[1,64], index: 6, kind: input, shape index: {}]
  %s7 = inlined_call_operand.vmem [shape: f32[8,8,64], index: 7, kind: output, shape index: {}]
  %s8 = sld [smem:[#allocation0]]
  $region42: #{bidirectional_rnn.1} parent=0
    _
  %s10 = ssub.s32 1, %s8
  %s11 = scalar_select 0, %s10, %s8
  // Predicated region
  $region2: #{bidirectional_rnn.1} parent=0 // pred_check
    _
  $region3: #{bidirectional_rnn.1} parent=0 // pred_check_branch
    %13 = sbr.rel (0) target = $region5
  $region4: #{bidirectional_rnn.1} parent=0 // pred_region
    _
  $region5: #{bidirectional_rnn.1} parent=0 // pred_fallthru
    _
  // Predicated region
  $region6: #{bidirectional_rnn.1} parent=0 // pred_check
    _
  $region7: #{bidirectional_rnn.1} parent=0 // pred_check_branch
    %15 = sbr.rel (0) target = $region9
  $region8: #{bidirectional_rnn.1} parent=0 // pred_region
    _
  $region9: #{bidirectional_rnn.1} parent=0 // pred_fallthru
    _
  // Predicated region
  $region10: #{bidirectional_rnn.1} parent=0 // pred_check
    _
  $region11: #{bidirectional_rnn.1} parent=0 // pred_check_branch
    %17 = sbr.rel (0) target = $region13
  $region12: #{bidirectional_rnn.1} parent=0 // pred_region
    _
  $region13: #{bidirectional_rnn.1} parent=0 // pred_fallthru
    _
  // Predicated region
  $region14: #{bidirectional_rnn.1} parent=0 // pred_check
    _
  $region15: #{bidirectional_rnn.1} parent=0 // pred_check_branch
    %19 = sbr.rel (0) target = $region17
  $region16: #{bidirectional_rnn.1} parent=0 // pred_region
    _
  $region17: #{bidirectional_rnn.1} parent=0 // pred_fallthru
    _
  // Predicated region
  $region18: #{bidirectional_rnn.1} parent=0 // pred_check
    _
  $region19: #{bidirectional_rnn.1} parent=0 // pred_check_branch
    %21 = sbr.rel (0) target = $region21
  $region20: #{bidirectional_rnn.1} parent=0 // pred_region
    _
  $region21: #{bidirectional_rnn.1} parent=0 // pred_fallthru
    _
  // Predicated region
  $region22: #{bidirectional_rnn.1} parent=0 // pred_check
    _
  $region23: #{bidirectional_rnn.1} parent=0 // pred_check_branch
    %23 = sbr.rel (0) target = $region25
  $region24: #{bidirectional_rnn.1} parent=0 // pred_region
    _
  $region25: #{bidirectional_rnn.1} parent=0 // pred_fallthru
    _
  // Predicated region
  $region26: #{bidirectional_rnn.1} parent=0 // pred_check
    _
  $region27: #{bidirectional_rnn.1} parent=0 // pred_check_branch
    %25 = sbr.rel (0) target = $region29
  $region28: #{bidirectional_rnn.1} parent=0 // pred_region
    _
  $region29: #{bidirectional_rnn.1} parent=0 // pred_fallthru
    _
  %p26 = scmp.eq.s32.totalorder 0, 0
  // Predicated region
  $region30: #{bidirectional_rnn.1} parent=0 // pred_check
    %p27 = pneg %p26
  $region31: #{bidirectional_rnn.1} parent=0 // pred_check_branch
    %29 = sbr.rel (%p27) target = $region33
  $region32: #{bidirectional_rnn.1} parent=0 // pred_region
    %vm30 = vcmask 523264
    %31 = vst.msk [vmem:[#allocation2] sm:$0xff] %vm30, 0.0
  $region33: #{bidirectional_rnn.1} parent=0 // pred_fallthru
    _
  %v32 = vld [vmem:[%s0] sm:$0xff]
  %v33 = vld [vmem:[%s0 + $0x8] sm:$0xff]
  %v34 = vld [vmem:[%s0 + $0x10] sm:$0xff]
  %v35 = vld [vmem:[%s0 + $0x18] sm:$0xff]
  %v36 = vld [vmem:[%s0 + $0x20] sm:$0xff]
  %v37 = vld [vmem:[%s0 + $0x28] sm:$0xff]
  %v38 = vld [vmem:[%s0 + $0x30] sm:$0xff]
  %v39 = vld [vmem:[%s0 + $0x38] sm:$0xff]
  %v40 = vld [vmem:[%s1] sm:$0xff]
  %v41 = vld [vmem:[%s1 + $0x8] sm:$0xff]
  %v42 = vld [vmem:[%s1 + $0x10] sm:$0xff]
  %v43 = vld [vmem:[%s1 + $0x18] sm:$0xff]
  %v44 = vld [vmem:[%s1 + $0x20] sm:$0xff]
  %v45 = vld [vmem:[%s1 + $0x28] sm:$0xff]
  %v46 = vld [vmem:[%s1 + $0x30] sm:$0xff]
  %v47 = vld [vmem:[%s1 + $0x38] sm:$0xff]
  %v48 = vld [vmem:[%s3] sm:$0xff]
  %v49 = vld [vmem:[%s3 + $0x8] sm:$0xff]
  %v50 = vld [vmem:[%s3 + $0x10] sm:$0xff]
  %v51 = vld [vmem:[%s3 + $0x18] sm:$0xff]
  %vm52 = vcmask 261120
  %v54 = vsel %vm52, %v32, 0
  %v57 = vsel %vm52, %v33, 0
  %v60 = vsel %vm52, %v34, 0
  %v63 = vsel %vm52, %v35, 0
  %v66 = vsel %vm52, %v36, 0
  %v69 = vsel %vm52, %v37, 0
  %v72 = vsel %vm52, %v38, 0
  %v75 = vsel %vm52, %v39, 0
  %77 = vmatprep.subr.mxu0 0.0
  %78 = vmatpush1.msra.mxu0 0.0
  %79 = vmatprep.subr.mxu0 0.0
  %80 = vmatpush1.msra.mxu0 0.0
  %81 = vmatprep.subr.mxu0 0.0
  %82 = vmatpush1.msra.mxu0 0.0
  %83 = vmatprep.subr.mxu0 0.0
  %84 = vmatpush1.msra.mxu0 0.0
  %85 = vmatprep.subr.mxu0 0.0
  %86 = vmatpush1.msra.mxu0 0.0
  %87 = vmatprep.subr.mxu0 0.0
  %88 = vmatpush1.msra.mxu0 0.0
  %89 = vmatprep.subr.mxu0 0.0
  %90 = vmatpush1.msra.mxu0 0.0
  %91 = vmatprep.subr.mxu0 0.0
  %92 = vmatpush1.msra.mxu0 0.0
  %93 = vmatprep.subr.mxu0 0.0
  %94 = vmatpush1.msra.mxu0 0.0
  %95 = vmatprep.subr.mxu0 0.0
  %96 = vmatpush1.msra.mxu0 0.0
  %97 = vmatprep.subr.mxu0 0.0
  %98 = vmatpush1.msra.mxu0 0.0
  %99 = vmatprep.subr.mxu0 0.0
  %100 = vmatpush1.msra.mxu0 0.0
  %101 = vmatprep.subr.mxu0 0.0
  %102 = vmatpush1.msra.mxu0 %v51
  %103 = vmatprep.subr.mxu0 0.0
  %104 = vmatpush1.msra.mxu0 %v50
  %105 = vmatprep.subr.mxu0 0.0
  %106 = vmatpush1.msra.mxu0 %v49
  %107 = vmatprep.subr.mxu0 0.0
  %108 = vmatpush1.msra.mxu0 %v48
  %109 = vmatprep.subr.mxu0 0.0
  %110 = vmatpush2.msra.mxu0 0.0
  %111 = vmatprep.subr.mxu0 0.0
  %112 = vmatpush2.msra.mxu0 0.0
  %113 = vmatprep.subr.mxu0 0.0
  %114 = vmatpush2.msra.mxu0 0.0
  %115 = vmatprep.subr.mxu0 0.0
  %116 = vmatpush2.msra.mxu0 0.0
  %117 = vmatprep.subr.mxu0 0.0
  %118 = vmatpush2.msra.mxu0 0.0
  %119 = vmatprep.subr.mxu0 0.0
  %120 = vmatpush2.msra.mxu0 0.0
  %121 = vmatprep.subr.mxu0 0.0
  %122 = vmatpush2.msra.mxu0 0.0
  %123 = vmatprep.subr.mxu0 0.0
  %124 = vmatpush2.msra.mxu0 0.0
  %125 = vmatprep.subr.mxu0 0.0
  %126 = vmatpush2.msra.mxu0 0.0
  %127 = vmatprep.subr.mxu0 0.0
  %128 = vmatpush2.msra.mxu0 0.0
  %129 = vmatprep.subr.mxu0 0.0
  %130 = vmatpush2.msra.mxu0 0.0
  %131 = vmatprep.subr.mxu0 0.0
  %132 = vmatpush2.msra.mxu0 0.0
  %133 = vmatprep.subr.mxu0 0.0
  %134 = vmatpush2.msra.mxu0 0.0
  %135 = vmatprep.subr.mxu0 0.0
  %136 = vmatpush2.msra.mxu0 0.0
  %137 = vmatprep.subr.mxu0 0.0
  %138 = vmatpush2.msra.mxu0 0.0
  %139 = vmatprep.subr.mxu0 0.0
  %140 = vmatpush2.msra.mxu0 0.0
  %141 = vmatprep.mubr.f32.mxu0 0.0
  %142 = vmatmul.mubr.f32.gmra.mxu0 %v54
  %v143 = vpop.f32.mrf.mxu0
  %v144 = vadd.f32 0.0, %v143
  %v145 = vpop.f32.mrf.mxu0
  %146 = vmatprep.mubr.f32.mxu0 0.0
  %147 = vmatmul.mubr.f32.gmra.mxu0 %v57
  %v148 = vpop.f32.mrf.mxu0
  %v149 = vadd.f32 0.0, %v148
  %v150 = vpop.f32.mrf.mxu0
  %151 = vmatprep.mubr.f32.mxu0 0.0
  %152 = vmatmul.mubr.f32.gmra.mxu0 %v60
  %v153 = vpop.f32.mrf.mxu0
  %v154 = vadd.f32 0.0, %v153
  %v155 = vpop.f32.mrf.mxu0
  %156 = vmatprep.mubr.f32.mxu0 0.0
  %157 = vmatmul.mubr.f32.gmra.mxu0 %v63
  %v158 = vpop.f32.mrf.mxu0
  %v159 = vadd.f32 0.0, %v158
  %v160 = vpop.f32.mrf.mxu0
  %161 = vmatprep.mubr.f32.mxu0 0.0
  %162 = vmatmul.mubr.f32.gmra.mxu0 %v66
  %v163 = vpop.f32.mrf.mxu0
  %v164 = vadd.f32 0.0, %v163
  %v165 = vpop.f32.mrf.mxu0
  %166 = vmatprep.mubr.f32.mxu0 0.0
  %167 = vmatmul.mubr.f32.gmra.mxu0 %v69
  %v168 = vpop.f32.mrf.mxu0
  %v169 = vadd.f32 0.0, %v168
  %v170 = vpop.f32.mrf.mxu0
  %171 = vmatprep.mubr.f32.mxu0 0.0
  %172 = vmatmul.mubr.f32.gmra.mxu0 %v72
  %v173 = vpop.f32.mrf.mxu0
  %v174 = vadd.f32 0.0, %v173
  %v175 = vpop.f32.mrf.mxu0
  %176 = vmatprep.mubr.f32.mxu0 0.0
  %177 = vmatmul.mubr.f32.gmra.mxu0 %v75
  %v178 = vpop.f32.mrf.mxu0
  %v179 = vadd.f32 0.0, %v178
  %v180 = vpop.f32.mrf.mxu0
  %181 = vdwg.mxu0
  %v182 = vld [vmem:[%s4] sm:$0xff]
  %v183 = vld [vmem:[%s4 + $0x8] sm:$0xff]
  %v184 = vld [vmem:[%s4 + $0x10] sm:$0xff]
  %v185 = vld [vmem:[%s4 + $0x18] sm:$0xff]
  %v187 = vsel %vm52, %v40, 0
  %v190 = vsel %vm52, %v41, 0
  %v193 = vsel %vm52, %v42, 0
  %v196 = vsel %vm52, %v43, 0
  %v199 = vsel %vm52, %v44, 0
  %v202 = vsel %vm52, %v45, 0
  %v205 = vsel %vm52, %v46, 0
  %v208 = vsel %vm52, %v47, 0
  %210 = vmatprep.subr.mxu0 0.0
  %211 = vmatpush1.msra.mxu0 0.0
  %212 = vmatprep.subr.mxu0 0.0
  %213 = vmatpush1.msra.mxu0 0.0
  %214 = vmatprep.subr.mxu0 0.0
  %215 = vmatpush1.msra.mxu0 0.0
  %216 = vmatprep.subr.mxu0 0.0
  %217 = vmatpush1.msra.mxu0 0.0
  %218 = vmatprep.subr.mxu0 0.0
  %219 = vmatpush1.msra.mxu0 0.0
  %220 = vmatprep.subr.mxu0 0.0
  %221 = vmatpush1.msra.mxu0 0.0
  %222 = vmatprep.subr.mxu0 0.0
  %223 = vmatpush1.msra.mxu0 0.0
  %224 = vmatprep.subr.mxu0 0.0
  %225 = vmatpush1.msra.mxu0 0.0
  %226 = vmatprep.subr.mxu0 0.0
  %227 = vmatpush1.msra.mxu0 0.0
  %228 = vmatprep.subr.mxu0 0.0
  %229 = vmatpush1.msra.mxu0 0.0
  %230 = vmatprep.subr.mxu0 0.0
  %231 = vmatpush1.msra.mxu0 0.0
  %232 = vmatprep.subr.mxu0 0.0
  %233 = vmatpush1.msra.mxu0 0.0
  %234 = vmatprep.subr.mxu0 0.0
  %235 = vmatpush1.msra.mxu0 %v185
  %236 = vmatprep.subr.mxu0 0.0
  %237 = vmatpush1.msra.mxu0 %v184
  %238 = vmatprep.subr.mxu0 0.0
  %239 = vmatpush1.msra.mxu0 %v183
  %240 = vmatprep.subr.mxu0 0.0
  %241 = vmatpush1.msra.mxu0 %v182
  %242 = vmatprep.subr.mxu0 0.0
  %243 = vmatpush2.msra.mxu0 0.0
  %244 = vmatprep.subr.mxu0 0.0
  %245 = vmatpush2.msra.mxu0 0.0
  %246 = vmatprep.subr.mxu0 0.0
  %247 = vmatpush2.msra.mxu0 0.0
  %248 = vmatprep.subr.mxu0 0.0
  %249 = vmatpush2.msra.mxu0 0.0
  %250 = vmatprep.subr.mxu0 0.0
  %251 = vmatpush2.msra.mxu0 0.0
  %252 = vmatprep.subr.mxu0 0.0
  %253 = vmatpush2.msra.mxu0 0.0
  %254 = vmatprep.subr.mxu0 0.0
  %255 = vmatpush2.msra.mxu0 0.0
  %256 = vmatprep.subr.mxu0 0.0
  %257 = vmatpush2.msra.mxu0 0.0
  %258 = vmatprep.subr.mxu0 0.0
  %259 = vmatpush2.msra.mxu0 0.0
  %260 = vmatprep.subr.mxu0 0.0
  %261 = vmatpush2.msra.mxu0 0.0
  %262 = vmatprep.subr.mxu0 0.0
  %263 = vmatpush2.msra.mxu0 0.0
  %264 = vmatprep.subr.mxu0 0.0
  %265 = vmatpush2.msra.mxu0 0.0
  %266 = vmatprep.subr.mxu0 0.0
  %267 = vmatpush2.msra.mxu0 0.0
  %268 = vmatprep.subr.mxu0 0.0
  %269 = vmatpush2.msra.mxu0 0.0
  %270 = vmatprep.subr.mxu0 0.0
  %271 = vmatpush2.msra.mxu0 0.0
  %272 = vmatprep.subr.mxu0 0.0
  %273 = vmatpush2.msra.mxu0 0.0
  %274 = vmatprep.mubr.f32.mxu0 0.0
  %275 = vmatmul.mubr.f32.gmra.mxu0 %v187
  %v276 = vpop.f32.mrf.mxu0
  %v277 = vadd.f32 0.0, %v276
  %v278 = vpop.f32.mrf.mxu0
  %279 = vmatprep.mubr.f32.mxu0 0.0
  %280 = vmatmul.mubr.f32.gmra.mxu0 %v190
  %v281 = vpop.f32.mrf.mxu0
  %v282 = vadd.f32 0.0, %v281
  %v283 = vpop.f32.mrf.mxu0
  %284 = vmatprep.mubr.f32.mxu0 0.0
  %285 = vmatmul.mubr.f32.gmra.mxu0 %v193
  %v286 = vpop.f32.mrf.mxu0
  %v287 = vadd.f32 0.0, %v286
  %v288 = vpop.f32.mrf.mxu0
  %289 = vmatprep.mubr.f32.mxu0 0.0
  %290 = vmatmul.mubr.f32.gmra.mxu0 %v196
  %v291 = vpop.f32.mrf.mxu0
  %v292 = vadd.f32 0.0, %v291
  %v293 = vpop.f32.mrf.mxu0
  %294 = vmatprep.mubr.f32.mxu0 0.0
  %295 = vmatmul.mubr.f32.gmra.mxu0 %v199
  %v296 = vpop.f32.mrf.mxu0
  %v297 = vadd.f32 0.0, %v296
  %v298 = vpop.f32.mrf.mxu0
  %299 = vmatprep.mubr.f32.mxu0 0.0
  %300 = vmatmul.mubr.f32.gmra.mxu0 %v202
  %v301 = vpop.f32.mrf.mxu0
  %v302 = vadd.f32 0.0, %v301
  %v303 = vpop.f32.mrf.mxu0
  %304 = vmatprep.mubr.f32.mxu0 0.0
  %305 = vmatmul.mubr.f32.gmra.mxu0 %v205
  %v306 = vpop.f32.mrf.mxu0
  %v307 = vadd.f32 0.0, %v306
  %v308 = vpop.f32.mrf.mxu0
  %309 = vmatprep.mubr.f32.mxu0 0.0
  %310 = vmatmul.mubr.f32.gmra.mxu0 %v208
  %v311 = vpop.f32.mrf.mxu0
  %v312 = vadd.f32 0.0, %v311
  %v313 = vpop.f32.mrf.mxu0
  %314 = vdwg.mxu0
  %323 = vrot.lane.b32.xlu0 %v277, 32
  %v324 = vpop.permute.xlu0 %323
  %325 = vrot.lane.b32.xlu0 %v282, 32
  %v326 = vpop.permute.xlu0 %325
  %327 = vrot.lane.b32.xlu0 %v287, 32
  %v328 = vpop.permute.xlu0 %327
  %329 = vrot.lane.b32.xlu0 %v292, 32
  %v330 = vpop.permute.xlu0 %329
  %331 = vrot.lane.b32.xlu0 %v297, 32
  %v332 = vpop.permute.xlu0 %331
  %333 = vrot.lane.b32.xlu0 %v302, 32
  %v334 = vpop.permute.xlu0 %333
  %335 = vrot.lane.b32.xlu0 %v307, 32
  %v336 = vpop.permute.xlu0 %335
  %337 = vrot.lane.b32.xlu0 %v312, 32
  %v338 = vpop.permute.xlu0 %337
  %v347 = vsel %vm52, %v144, %v324
  %v348 = vsel %vm52, %v149, %v326
  %v349 = vsel %vm52, %v154, %v328
  %v350 = vsel %vm52, %v159, %v330
  %v351 = vsel %vm52, %v164, %v332
  %v352 = vsel %vm52, %v169, %v334
  %v353 = vsel %vm52, %v174, %v336
  %v354 = vsel %vm52, %v179, %v338
  %v355 = vld [vmem:[%s6] sm:$0x1]
  %v357 = vlaneseq
  %v358 = vshrl.u32 %v357, 7
  %v359 = vsub.s32 0, %v358
  %v360 = vrot.slane %v355, %v359
  %v362 = vadd.f32 %v347, %v360
  %v363 = vadd.f32 %v348, %v360
  %v364 = vadd.f32 %v349, %v360
  %v365 = vadd.f32 %v350, %v360
  %v366 = vadd.f32 %v351, %v360
  %v367 = vadd.f32 %v352, %v360
  %v368 = vadd.f32 %v353, %v360
  %v369 = vadd.f32 %v354, %v360
  %vm370 = vcmask 523264
  %371 = vst.msk [vmem:[#allocation3] sm:$0xff] %vm370, %v362
  %372 = vst.msk [vmem:[#allocation3 + $0x8] sm:$0xff] %vm370, %v363
  %373 = vst.msk [vmem:[#allocation3 + $0x10] sm:$0xff] %vm370, %v364
  %374 = vst.msk [vmem:[#allocation3 + $0x18] sm:$0xff] %vm370, %v365
  %375 = vst.msk [vmem:[#allocation3 + $0x20] sm:$0xff] %vm370, %v366
  %376 = vst.msk [vmem:[#allocation3 + $0x28] sm:$0xff] %vm370, %v367
  %377 = vst.msk [vmem:[#allocation3 + $0x30] sm:$0xff] %vm370, %v368
  %378 = vst.msk [vmem:[#allocation3 + $0x38] sm:$0xff] %vm370, %v369
  %v379 = vld [vmem:[%s5] sm:$0xff]
  %v380 = vld [vmem:[%s5 + $0x8] sm:$0xff]
  %v381 = vld [vmem:[%s5 + $0x10] sm:$0xff]
  %v382 = vld [vmem:[%s5 + $0x18] sm:$0xff]
  %v383 = vld [vmem:[%s5 + $0x20] sm:$0xff]
  %v384 = vld [vmem:[%s5 + $0x28] sm:$0xff]
  %v385 = vld [vmem:[%s5 + $0x30] sm:$0xff]
  %v386 = vld [vmem:[%s5 + $0x38] sm:$0xff]
  %v387 = vld [vmem:[#allocation2] sm:$0xff]
  %v388 = vld [vmem:[%s2] sm:$0xff]
  %v389 = vld [vmem:[#allocation3] sm:$0xff]
  %v391 = vsel %vm370, %v387, 0
  %393 = vmatprep.subr.mxu0 0.0
  %394 = vmatpush1.msra.mxu0 0.0
  %395 = vmatprep.subr.mxu0 0.0
  %396 = vmatpush1.msra.mxu0 0.0
  %397 = vmatprep.subr.mxu0 0.0
  %398 = vmatpush1.msra.mxu0 0.0
  %399 = vmatprep.subr.mxu0 0.0
  %400 = vmatpush1.msra.mxu0 0.0
  %401 = vmatprep.subr.mxu0 0.0
  %402 = vmatpush1.msra.mxu0 0.0
  %403 = vmatprep.subr.mxu0 0.0
  %404 = vmatpush1.msra.mxu0 0.0
  %405 = vmatprep.subr.mxu0 0.0
  %406 = vmatpush1.msra.mxu0 0.0
  %407 = vmatprep.subr.mxu0 0.0
  %408 = vmatpush1.msra.mxu0 0.0
  %409 = vmatprep.subr.mxu0 0.0
  %410 = vmatpush1.msra.mxu0 %v386
  %411 = vmatprep.subr.mxu0 0.0
  %412 = vmatpush1.msra.mxu0 %v385
  %413 = vmatprep.subr.mxu0 0.0
  %414 = vmatpush1.msra.mxu0 %v384
  %415 = vmatprep.subr.mxu0 0.0
  %416 = vmatpush1.msra.mxu0 %v383
  %417 = vmatprep.subr.mxu0 0.0
  %418 = vmatpush1.msra.mxu0 %v382
  %419 = vmatprep.subr.mxu0 0.0
  %420 = vmatpush1.msra.mxu0 %v381
  %421 = vmatprep.subr.mxu0 0.0
  %422 = vmatpush1.msra.mxu0 %v380
  %423 = vmatprep.subr.mxu0 0.0
  %424 = vmatpush1.msra.mxu0 %v379
  %425 = vmatprep.subr.mxu0 0.0
  %426 = vmatpush2.msra.mxu0 0.0
  %427 = vmatprep.subr.mxu0 0.0
  %428 = vmatpush2.msra.mxu0 0.0
  %429 = vmatprep.subr.mxu0 0.0
  %430 = vmatpush2.msra.mxu0 0.0
  %431 = vmatprep.subr.mxu0 0.0
  %432 = vmatpush2.msra.mxu0 0.0
  %433 = vmatprep.subr.mxu0 0.0
  %434 = vmatpush2.msra.mxu0 0.0
  %435 = vmatprep.subr.mxu0 0.0
  %436 = vmatpush2.msra.mxu0 0.0
  %437 = vmatprep.subr.mxu0 0.0
  %438 = vmatpush2.msra.mxu0 0.0
  %439 = vmatprep.subr.mxu0 0.0
  %440 = vmatpush2.msra.mxu0 0.0
  %441 = vmatprep.subr.mxu0 0.0
  %442 = vmatpush2.msra.mxu0 0.0
  %443 = vmatprep.subr.mxu0 0.0
  %444 = vmatpush2.msra.mxu0 0.0
  %445 = vmatprep.subr.mxu0 0.0
  %446 = vmatpush2.msra.mxu0 0.0
  %447 = vmatprep.subr.mxu0 0.0
  %448 = vmatpush2.msra.mxu0 0.0
  %449 = vmatprep.subr.mxu0 0.0
  %450 = vmatpush2.msra.mxu0 0.0
  %451 = vmatprep.subr.mxu0 0.0
  %452 = vmatpush2.msra.mxu0 0.0
  %453 = vmatprep.subr.mxu0 0.0
  %454 = vmatpush2.msra.mxu0 0.0
  %455 = vmatprep.subr.mxu0 0.0
  %456 = vmatpush2.msra.mxu0 0.0
  %457 = vmatprep.mubr.f32.mxu0 0.0
  %458 = vmatmul.mubr.f32.gmra.mxu0 %v391
  %v459 = vpop.f32.mrf.mxu0
  %v460 = vadd.f32 0.0, %v459
  %v461 = vpop.f32.mrf.mxu0
  %462 = vdwg.mxu0
  %v463 = vadd.f32 %v389, %v460
  %v464 = vtanh.pop %v463
  %vm465 = vcmp.gt.f32.partialorder %v388, 0.5
  %v466 = vsel %vm465, 1, 0
  %467 = vset.pattern.permute.xlu0 0
  %468 = vperm.xlu0 %467, %v466
  %v469 = vpop.permute.xlu0 %468
  %vm470 = vcmp.eq.s32.totalorder %v469, 1
  %v471 = vsel %vm470, %v464, %v387
  %472 = vst.msk [vmem:[%s7] sm:$0xff] %vm370, %v471
  %s473 = scalar_lea.vmem %s2, 8
  %v474 = vld [vmem:[%s473] sm:$0xff]
  %s475 = scalar_lea.vmem [#allocation3], 8
  %v476 = vld [vmem:[%s475] sm:$0xff]
  %v478 = vsel %vm370, %v471, 0
  %480 = vmatprep.subr.mxu0 0.0
  %481 = vmatpush1.msra.mxu0 0.0
  %482 = vmatprep.subr.mxu0 0.0
  %483 = vmatpush1.msra.mxu0 0.0
  %484 = vmatprep.subr.mxu0 0.0
  %485 = vmatpush1.msra.mxu0 0.0
  %486 = vmatprep.subr.mxu0 0.0
  %487 = vmatpush1.msra.mxu0 0.0
  %488 = vmatprep.subr.mxu0 0.0
  %489 = vmatpush1.msra.mxu0 0.0
  %490 = vmatprep.subr.mxu0 0.0
  %491 = vmatpush1.msra.mxu0 0.0
  %492 = vmatprep.subr.mxu0 0.0
  %493 = vmatpush1.msra.mxu0 0.0
  %494 = vmatprep.subr.mxu0 0.0
  %495 = vmatpush1.msra.mxu0 0.0
  %496 = vmatprep.subr.mxu0 0.0
  %497 = vmatpush1.msra.mxu0 %v386
  %498 = vmatprep.subr.mxu0 0.0
  %499 = vmatpush1.msra.mxu0 %v385
  %500 = vmatprep.subr.mxu0 0.0
  %501 = vmatpush1.msra.mxu0 %v384
  %502 = vmatprep.subr.mxu0 0.0
  %503 = vmatpush1.msra.mxu0 %v383
  %504 = vmatprep.subr.mxu0 0.0
  %505 = vmatpush1.msra.mxu0 %v382
  %506 = vmatprep.subr.mxu0 0.0
  %507 = vmatpush1.msra.mxu0 %v381
  %508 = vmatprep.subr.mxu0 0.0
  %509 = vmatpush1.msra.mxu0 %v380
  %510 = vmatprep.subr.mxu0 0.0
  %511 = vmatpush1.msra.mxu0 %v379
  %512 = vmatprep.subr.mxu0 0.0
  %513 = vmatpush2.msra.mxu0 0.0
  %514 = vmatprep.subr.mxu0 0.0
  %515 = vmatpush2.msra.mxu0 0.0
  %516 = vmatprep.subr.mxu0 0.0
  %517 = vmatpush2.msra.mxu0 0.0
  %518 = vmatprep.subr.mxu0 0.0
  %519 = vmatpush2.msra.mxu0 0.0
  %520 = vmatprep.subr.mxu0 0.0
  %521 = vmatpush2.msra.mxu0 0.0
  %522 = vmatprep.subr.mxu0 0.0
  %523 = vmatpush2.msra.mxu0 0.0
  %524 = vmatprep.subr.mxu0 0.0
  %525 = vmatpush2.msra.mxu0 0.0
  %526 = vmatprep.subr.mxu0 0.0
  %527 = vmatpush2.msra.mxu0 0.0
  %528 = vmatprep.subr.mxu0 0.0
  %529 = vmatpush2.msra.mxu0 0.0
  %530 = vmatprep.subr.mxu0 0.0
  %531 = vmatpush2.msra.mxu0 0.0
  %532 = vmatprep.subr.mxu0 0.0
  %533 = vmatpush2.msra.mxu0 0.0
  %534 = vmatprep.subr.mxu0 0.0
  %535 = vmatpush2.msra.mxu0 0.0
  %536 = vmatprep.subr.mxu0 0.0
  %537 = vmatpush2.msra.mxu0 0.0
  %538 = vmatprep.subr.mxu0 0.0
  %539 = vmatpush2.msra.mxu0 0.0
  %540 = vmatprep.subr.mxu0 0.0
  %541 = vmatpush2.msra.mxu0 0.0
  %542 = vmatprep.subr.mxu0 0.0
  %543 = vmatpush2.msra.mxu0 0.0
  %544 = vmatprep.mubr.f32.mxu0 0.0
  %545 = vmatmul.mubr.f32.gmra.mxu0 %v478
  %v546 = vpop.f32.mrf.mxu0
  %v547 = vadd.f32 0.0, %v546
  %v548 = vpop.f32.mrf.mxu0
  %549 = vdwg.mxu0
  %v550 = vadd.f32 %v476, %v547
  %v551 = vtanh.pop %v550
  %vm552 = vcmp.gt.f32.partialorder %v474, 0.5
  %v553 = vsel %vm552, 1, 0
  %554 = vset.pattern.permute.xlu0 0
  %555 = vperm.xlu0 %554, %v553
  %v556 = vpop.permute.xlu0 %555
  %vm557 = vcmp.eq.s32.totalorder %v556, 1
  %v558 = vsel %vm557, %v551, %v471
  %s559 = scalar_lea.vmem %s7, 8
  %560 = vst.msk [vmem:[%s559] sm:$0xff] %vm370, %v558
  %s561 = scalar_lea.vmem %s2, 16
  %v562 = vld [vmem:[%s561] sm:$0xff]
  %s563 = scalar_lea.vmem [#allocation3], 16
  %v564 = vld [vmem:[%s563] sm:$0xff]
  %v566 = vsel %vm370, %v558, 0
  %568 = vmatprep.subr.mxu0 0.0
  %569 = vmatpush1.msra.mxu0 0.0
  %570 = vmatprep.subr.mxu0 0.0
  %571 = vmatpush1.msra.mxu0 0.0
  %572 = vmatprep.subr.mxu0 0.0
  %573 = vmatpush1.msra.mxu0 0.0
  %574 = vmatprep.subr.mxu0 0.0
  %575 = vmatpush1.msra.mxu0 0.0
  %576 = vmatprep.subr.mxu0 0.0
  %577 = vmatpush1.msra.mxu0 0.0
  %578 = vmatprep.subr.mxu0 0.0
  %579 = vmatpush1.msra.mxu0 0.0
  %580 = vmatprep.subr.mxu0 0.0
  %581 = vmatpush1.msra.mxu0 0.0
  %582 = vmatprep.subr.mxu0 0.0
  %583 = vmatpush1.msra.mxu0 0.0
  %584 = vmatprep.subr.mxu0 0.0
  %585 = vmatpush1.msra.mxu0 %v386
  %586 = vmatprep.subr.mxu0 0.0
  %587 = vmatpush1.msra.mxu0 %v385
  %588 = vmatprep.subr.mxu0 0.0
  %589 = vmatpush1.msra.mxu0 %v384
  %590 = vmatprep.subr.mxu0 0.0
  %591 = vmatpush1.msra.mxu0 %v383
  %592 = vmatprep.subr.mxu0 0.0
  %593 = vmatpush1.msra.mxu0 %v382
  %594 = vmatprep.subr.mxu0 0.0
  %595 = vmatpush1.msra.mxu0 %v381
  %596 = vmatprep.subr.mxu0 0.0
  %597 = vmatpush1.msra.mxu0 %v380
  %598 = vmatprep.subr.mxu0 0.0
  %599 = vmatpush1.msra.mxu0 %v379
  %600 = vmatprep.subr.mxu0 0.0
  %601 = vmatpush2.msra.mxu0 0.0
  %602 = vmatprep.subr.mxu0 0.0
  %603 = vmatpush2.msra.mxu0 0.0
  %604 = vmatprep.subr.mxu0 0.0
  %605 = vmatpush2.msra.mxu0 0.0
  %606 = vmatprep.subr.mxu0 0.0
  %607 = vmatpush2.msra.mxu0 0.0
  %608 = vmatprep.subr.mxu0 0.0
  %609 = vmatpush2.msra.mxu0 0.0
  %610 = vmatprep.subr.mxu0 0.0
  %611 = vmatpush2.msra.mxu0 0.0
  %612 = vmatprep.subr.mxu0 0.0
  %613 = vmatpush2.msra.mxu0 0.0
  %614 = vmatprep.subr.mxu0 0.0
  %615 = vmatpush2.msra.mxu0 0.0
  %616 = vmatprep.subr.mxu0 0.0
  %617 = vmatpush2.msra.mxu0 0.0
  %618 = vmatprep.subr.mxu0 0.0
  %619 = vmatpush2.msra.mxu0 0.0
  %620 = vmatprep.subr.mxu0 0.0
  %621 = vmatpush2.msra.mxu0 0.0
  %622 = vmatprep.subr.mxu0 0.0
  %623 = vmatpush2.msra.mxu0 0.0
  %624 = vmatprep.subr.mxu0 0.0
  %625 = vmatpush2.msra.mxu0 0.0
  %626 = vmatprep.subr.mxu0 0.0
  %627 = vmatpush2.msra.mxu0 0.0
  %628 = vmatprep.subr.mxu0 0.0
  %629 = vmatpush2.msra.mxu0 0.0
  %630 = vmatprep.subr.mxu0 0.0
  %631 = vmatpush2.msra.mxu0 0.0
  %632 = vmatprep.mubr.f32.mxu0 0.0
  %633 = vmatmul.mubr.f32.gmra.mxu0 %v566
  %v634 = vpop.f32.mrf.mxu0
  %v635 = vadd.f32 0.0, %v634
  %v636 = vpop.f32.mrf.mxu0
  %637 = vdwg.mxu0
  %v638 = vadd.f32 %v564, %v635
  %v639 = vtanh.pop %v638
  %vm640 = vcmp.gt.f32.partialorder %v562, 0.5
  %v641 = vsel %vm640, 1, 0
  %642 = vset.pattern.permute.xlu0 0
  %643 = vperm.xlu0 %642, %v641
  %v644 = vpop.permute.xlu0 %643
  %vm645 = vcmp.eq.s32.totalorder %v644, 1
  %v646 = vsel %vm645, %v639, %v558
  %s647 = scalar_lea.vmem %s7, 16
  %648 = vst.msk [vmem:[%s647] sm:$0xff] %vm370, %v646
  %s649 = scalar_lea.vmem %s2, 24
  %v650 = vld [vmem:[%s649] sm:$0xff]
  %s651 = scalar_lea.vmem [#allocation3], 24
  %v652 = vld [vmem:[%s651] sm:$0xff]
  %v654 = vsel %vm370, %v646, 0
  %656 = vmatprep.subr.mxu0 0.0
  %657 = vmatpush1.msra.mxu0 0.0
  %658 = vmatprep.subr.mxu0 0.0
  %659 = vmatpush1.msra.mxu0 0.0
  %660 = vmatprep.subr.mxu0 0.0
  %661 = vmatpush1.msra.mxu0 0.0
  %662 = vmatprep.subr.mxu0 0.0
  %663 = vmatpush1.msra.mxu0 0.0
  %664 = vmatprep.subr.mxu0 0.0
  %665 = vmatpush1.msra.mxu0 0.0
  %666 = vmatprep.subr.mxu0 0.0
  %667 = vmatpush1.msra.mxu0 0.0
  %668 = vmatprep.subr.mxu0 0.0
  %669 = vmatpush1.msra.mxu0 0.0
  %670 = vmatprep.subr.mxu0 0.0
  %671 = vmatpush1.msra.mxu0 0.0
  %672 = vmatprep.subr.mxu0 0.0
  %673 = vmatpush1.msra.mxu0 %v386
  %674 = vmatprep.subr.mxu0 0.0
  %675 = vmatpush1.msra.mxu0 %v385
  %676 = vmatprep.subr.mxu0 0.0
  %677 = vmatpush1.msra.mxu0 %v384
  %678 = vmatprep.subr.mxu0 0.0
  %679 = vmatpush1.msra.mxu0 %v383
  %680 = vmatprep.subr.mxu0 0.0
  %681 = vmatpush1.msra.mxu0 %v382
  %682 = vmatprep.subr.mxu0 0.0
  %683 = vmatpush1.msra.mxu0 %v381
  %684 = vmatprep.subr.mxu0 0.0
  %685 = vmatpush1.msra.mxu0 %v380
  %686 = vmatprep.subr.mxu0 0.0
  %687 = vmatpush1.msra.mxu0 %v379
  %688 = vmatprep.subr.mxu0 0.0
  %689 = vmatpush2.msra.mxu0 0.0
  %690 = vmatprep.subr.mxu0 0.0
  %691 = vmatpush2.msra.mxu0 0.0
  %692 = vmatprep.subr.mxu0 0.0
  %693 = vmatpush2.msra.mxu0 0.0
  %694 = vmatprep.subr.mxu0 0.0
  %695 = vmatpush2.msra.mxu0 0.0
  %696 = vmatprep.subr.mxu0 0.0
  %697 = vmatpush2.msra.mxu0 0.0
  %698 = vmatprep.subr.mxu0 0.0
  %699 = vmatpush2.msra.mxu0 0.0
  %700 = vmatprep.subr.mxu0 0.0
  %701 = vmatpush2.msra.mxu0 0.0
  %702 = vmatprep.subr.mxu0 0.0
  %703 = vmatpush2.msra.mxu0 0.0
  %704 = vmatprep.subr.mxu0 0.0
  %705 = vmatpush2.msra.mxu0 0.0
  %706 = vmatprep.subr.mxu0 0.0
  %707 = vmatpush2.msra.mxu0 0.0
  %708 = vmatprep.subr.mxu0 0.0
  %709 = vmatpush2.msra.mxu0 0.0
  %710 = vmatprep.subr.mxu0 0.0
  %711 = vmatpush2.msra.mxu0 0.0
  %712 = vmatprep.subr.mxu0 0.0
  %713 = vmatpush2.msra.mxu0 0.0
  %714 = vmatprep.subr.mxu0 0.0
  %715 = vmatpush2.msra.mxu0 0.0
  %716 = vmatprep.subr.mxu0 0.0
  %717 = vmatpush2.msra.mxu0 0.0
  %718 = vmatprep.subr.mxu0 0.0
  %719 = vmatpush2.msra.mxu0 0.0
  %720 = vmatprep.mubr.f32.mxu0 0.0
  %721 = vmatmul.mubr.f32.gmra.mxu0 %v654
  %v722 = vpop.f32.mrf.mxu0
  %v723 = vadd.f32 0.0, %v722
  %v724 = vpop.f32.mrf.mxu0
  %725 = vdwg.mxu0
  %v726 = vadd.f32 %v652, %v723
  %v727 = vtanh.pop %v726
  %vm728 = vcmp.gt.f32.partialorder %v650, 0.5
  %v729 = vsel %vm728, 1, 0
  %730 = vset.pattern.permute.xlu0 0
  %731 = vperm.xlu0 %730, %v729
  %v732 = vpop.permute.xlu0 %731
  %vm733 = vcmp.eq.s32.totalorder %v732, 1
  %v734 = vsel %vm733, %v727, %v646
  %s735 = scalar_lea.vmem %s7, 24
  %736 = vst.msk [vmem:[%s735] sm:$0xff] %vm370, %v734
  %s737 = scalar_lea.vmem %s2, 32
  %v738 = vld [vmem:[%s737] sm:$0xff]
  %s739 = scalar_lea.vmem [#allocation3], 32
  %v740 = vld [vmem:[%s739] sm:$0xff]
  %v742 = vsel %vm370, %v734, 0
  %744 = vmatprep.subr.mxu0 0.0
  %745 = vmatpush1.msra.mxu0 0.0
  %746 = vmatprep.subr.mxu0 0.0
  %747 = vmatpush1.msra.mxu0 0.0
  %748 = vmatprep.subr.mxu0 0.0
  %749 = vmatpush1.msra.mxu0 0.0
  %750 = vmatprep.subr.mxu0 0.0
  %751 = vmatpush1.msra.mxu0 0.0
  %752 = vmatprep.subr.mxu0 0.0
  %753 = vmatpush1.msra.mxu0 0.0
  %754 = vmatprep.subr.mxu0 0.0
  %755 = vmatpush1.msra.mxu0 0.0
  %756 = vmatprep.subr.mxu0 0.0
  %757 = vmatpush1.msra.mxu0 0.0
  %758 = vmatprep.subr.mxu0 0.0
  %759 = vmatpush1.msra.mxu0 0.0
  %760 = vmatprep.subr.mxu0 0.0
  %761 = vmatpush1.msra.mxu0 %v386
  %762 = vmatprep.subr.mxu0 0.0
  %763 = vmatpush1.msra.mxu0 %v385
  %764 = vmatprep.subr.mxu0 0.0
  %765 = vmatpush1.msra.mxu0 %v384
  %766 = vmatprep.subr.mxu0 0.0
  %767 = vmatpush1.msra.mxu0 %v383
  %768 = vmatprep.subr.mxu0 0.0
  %769 = vmatpush1.msra.mxu0 %v382
  %770 = vmatprep.subr.mxu0 0.0
  %771 = vmatpush1.msra.mxu0 %v381
  %772 = vmatprep.subr.mxu0 0.0
  %773 = vmatpush1.msra.mxu0 %v380
  %774 = vmatprep.subr.mxu0 0.0
  %775 = vmatpush1.msra.mxu0 %v379
  %776 = vmatprep.subr.mxu0 0.0
  %777 = vmatpush2.msra.mxu0 0.0
  %778 = vmatprep.subr.mxu0 0.0
  %779 = vmatpush2.msra.mxu0 0.0
  %780 = vmatprep.subr.mxu0 0.0
  %781 = vmatpush2.msra.mxu0 0.0
  %782 = vmatprep.subr.mxu0 0.0
  %783 = vmatpush2.msra.mxu0 0.0
  %784 = vmatprep.subr.mxu0 0.0
  %785 = vmatpush2.msra.mxu0 0.0
  %786 = vmatprep.subr.mxu0 0.0
  %787 = vmatpush2.msra.mxu0 0.0
  %788 = vmatprep.subr.mxu0 0.0
  %789 = vmatpush2.msra.mxu0 0.0
  %790 = vmatprep.subr.mxu0 0.0
  %791 = vmatpush2.msra.mxu0 0.0
  %792 = vmatprep.subr.mxu0 0.0
  %793 = vmatpush2.msra.mxu0 0.0
  %794 = vmatprep.subr.mxu0 0.0
  %795 = vmatpush2.msra.mxu0 0.0
  %796 = vmatprep.subr.mxu0 0.0
  %797 = vmatpush2.msra.mxu0 0.0
  %798 = vmatprep.subr.mxu0 0.0
  %799 = vmatpush2.msra.mxu0 0.0
  %800 = vmatprep.subr.mxu0 0.0
  %801 = vmatpush2.msra.mxu0 0.0
  %802 = vmatprep.subr.mxu0 0.0
  %803 = vmatpush2.msra.mxu0 0.0
  %804 = vmatprep.subr.mxu0 0.0
  %805 = vmatpush2.msra.mxu0 0.0
  %806 = vmatprep.subr.mxu0 0.0
  %807 = vmatpush2.msra.mxu0 0.0
  %808 = vmatprep.mubr.f32.mxu0 0.0
  %809 = vmatmul.mubr.f32.gmra.mxu0 %v742
  %v810 = vpop.f32.mrf.mxu0
  %v811 = vadd.f32 0.0, %v810
  %v812 = vpop.f32.mrf.mxu0
  %813 = vdwg.mxu0
  %v814 = vadd.f32 %v740, %v811
  %v815 = vtanh.pop %v814
  %vm816 = vcmp.gt.f32.partialorder %v738, 0.5
  %v817 = vsel %vm816, 1, 0
  %818 = vset.pattern.permute.xlu0 0
  %819 = vperm.xlu0 %818, %v817
  %v820 = vpop.permute.xlu0 %819
  %vm821 = vcmp.eq.s32.totalorder %v820, 1
  %v822 = vsel %vm821, %v815, %v734
  %s823 = scalar_lea.vmem %s7, 32
  %824 = vst.msk [vmem:[%s823] sm:$0xff] %vm370, %v822
  %s825 = scalar_lea.vmem %s2, 40
  %v826 = vld [vmem:[%s825] sm:$0xff]
  %s827 = scalar_lea.vmem [#allocation3], 40
  %v828 = vld [vmem:[%s827] sm:$0xff]
  %v830 = vsel %vm370, %v822, 0
  %832 = vmatprep.subr.mxu0 0.0
  %833 = vmatpush1.msra.mxu0 0.0
  %834 = vmatprep.subr.mxu0 0.0
  %835 = vmatpush1.msra.mxu0 0.0
  %836 = vmatprep.subr.mxu0 0.0
  %837 = vmatpush1.msra.mxu0 0.0
  %838 = vmatprep.subr.mxu0 0.0
  %839 = vmatpush1.msra.mxu0 0.0
  %840 = vmatprep.subr.mxu0 0.0
  %841 = vmatpush1.msra.mxu0 0.0
  %842 = vmatprep.subr.mxu0 0.0
  %843 = vmatpush1.msra.mxu0 0.0
  %844 = vmatprep.subr.mxu0 0.0
  %845 = vmatpush1.msra.mxu0 0.0
  %846 = vmatprep.subr.mxu0 0.0
  %847 = vmatpush1.msra.mxu0 0.0
  %848 = vmatprep.subr.mxu0 0.0
  %849 = vmatpush1.msra.mxu0 %v386
  %850 = vmatprep.subr.mxu0 0.0
  %851 = vmatpush1.msra.mxu0 %v385
  %852 = vmatprep.subr.mxu0 0.0
  %853 = vmatpush1.msra.mxu0 %v384
  %854 = vmatprep.subr.mxu0 0.0
  %855 = vmatpush1.msra.mxu0 %v383
  %856 = vmatprep.subr.mxu0 0.0
  %857 = vmatpush1.msra.mxu0 %v382
  %858 = vmatprep.subr.mxu0 0.0
  %859 = vmatpush1.msra.mxu0 %v381
  %860 = vmatprep.subr.mxu0 0.0
  %861 = vmatpush1.msra.mxu0 %v380
  %862 = vmatprep.subr.mxu0 0.0
  %863 = vmatpush1.msra.mxu0 %v379
  %864 = vmatprep.subr.mxu0 0.0
  %865 = vmatpush2.msra.mxu0 0.0
  %866 = vmatprep.subr.mxu0 0.0
  %867 = vmatpush2.msra.mxu0 0.0
  %868 = vmatprep.subr.mxu0 0.0
  %869 = vmatpush2.msra.mxu0 0.0
  %870 = vmatprep.subr.mxu0 0.0
  %871 = vmatpush2.msra.mxu0 0.0
  %872 = vmatprep.subr.mxu0 0.0
  %873 = vmatpush2.msra.mxu0 0.0
  %874 = vmatprep.subr.mxu0 0.0
  %875 = vmatpush2.msra.mxu0 0.0
  %876 = vmatprep.subr.mxu0 0.0
  %877 = vmatpush2.msra.mxu0 0.0
  %878 = vmatprep.subr.mxu0 0.0
  %879 = vmatpush2.msra.mxu0 0.0
  %880 = vmatprep.subr.mxu0 0.0
  %881 = vmatpush2.msra.mxu0 0.0
  %882 = vmatprep.subr.mxu0 0.0
  %883 = vmatpush2.msra.mxu0 0.0
  %884 = vmatprep.subr.mxu0 0.0
  %885 = vmatpush2.msra.mxu0 0.0
  %886 = vmatprep.subr.mxu0 0.0
  %887 = vmatpush2.msra.mxu0 0.0
  %888 = vmatprep.subr.mxu0 0.0
  %889 = vmatpush2.msra.mxu0 0.0
  %890 = vmatprep.subr.mxu0 0.0
  %891 = vmatpush2.msra.mxu0 0.0
  %892 = vmatprep.subr.mxu0 0.0
  %893 = vmatpush2.msra.mxu0 0.0
  %894 = vmatprep.subr.mxu0 0.0
  %895 = vmatpush2.msra.mxu0 0.0
  %896 = vmatprep.mubr.f32.mxu0 0.0
  %897 = vmatmul.mubr.f32.gmra.mxu0 %v830
  %v898 = vpop.f32.mrf.mxu0
  %v899 = vadd.f32 0.0, %v898
  %v900 = vpop.f32.mrf.mxu0
  %901 = vdwg.mxu0
  %v902 = vadd.f32 %v828, %v899
  %v903 = vtanh.pop %v902
  %vm904 = vcmp.gt.f32.partialorder %v826, 0.5
  %v905 = vsel %vm904, 1, 0
  %906 = vset.pattern.permute.xlu0 0
  %907 = vperm.xlu0 %906, %v905
  %v908 = vpop.permute.xlu0 %907
  %vm909 = vcmp.eq.s32.totalorder %v908, 1
  %v910 = vsel %vm909, %v903, %v822
  %s911 = scalar_lea.vmem %s7, 40
  %912 = vst.msk [vmem:[%s911] sm:$0xff] %vm370, %v910
  %s913 = scalar_lea.vmem %s2, 48
  %v914 = vld [vmem:[%s913] sm:$0xff]
  %s915 = scalar_lea.vmem [#allocation3], 48
  %v916 = vld [vmem:[%s915] sm:$0xff]
  %v918 = vsel %vm370, %v910, 0
  %920 = vmatprep.subr.mxu0 0.0
  %921 = vmatpush1.msra.mxu0 0.0
  %922 = vmatprep.subr.mxu0 0.0
  %923 = vmatpush1.msra.mxu0 0.0
  %924 = vmatprep.subr.mxu0 0.0
  %925 = vmatpush1.msra.mxu0 0.0
  %926 = vmatprep.subr.mxu0 0.0
  %927 = vmatpush1.msra.mxu0 0.0
  %928 = vmatprep.subr.mxu0 0.0
  %929 = vmatpush1.msra.mxu0 0.0
  %930 = vmatprep.subr.mxu0 0.0
  %931 = vmatpush1.msra.mxu0 0.0
  %932 = vmatprep.subr.mxu0 0.0
  %933 = vmatpush1.msra.mxu0 0.0
  %934 = vmatprep.subr.mxu0 0.0
  %935 = vmatpush1.msra.mxu0 0.0
  %936 = vmatprep.subr.mxu0 0.0
  %937 = vmatpush1.msra.mxu0 %v386
  %938 = vmatprep.subr.mxu0 0.0
  %939 = vmatpush1.msra.mxu0 %v385
  %940 = vmatprep.subr.mxu0 0.0
  %941 = vmatpush1.msra.mxu0 %v384
  %942 = vmatprep.subr.mxu0 0.0
  %943 = vmatpush1.msra.mxu0 %v383
  %944 = vmatprep.subr.mxu0 0.0
  %945 = vmatpush1.msra.mxu0 %v382
  %946 = vmatprep.subr.mxu0 0.0
  %947 = vmatpush1.msra.mxu0 %v381
  %948 = vmatprep.subr.mxu0 0.0
  %949 = vmatpush1.msra.mxu0 %v380
  %950 = vmatprep.subr.mxu0 0.0
  %951 = vmatpush1.msra.mxu0 %v379
  %952 = vmatprep.subr.mxu0 0.0
  %953 = vmatpush2.msra.mxu0 0.0
  %954 = vmatprep.subr.mxu0 0.0
  %955 = vmatpush2.msra.mxu0 0.0
  %956 = vmatprep.subr.mxu0 0.0
  %957 = vmatpush2.msra.mxu0 0.0
  %958 = vmatprep.subr.mxu0 0.0
  %959 = vmatpush2.msra.mxu0 0.0
  %960 = vmatprep.subr.mxu0 0.0
  %961 = vmatpush2.msra.mxu0 0.0
  %962 = vmatprep.subr.mxu0 0.0
  %963 = vmatpush2.msra.mxu0 0.0
  %964 = vmatprep.subr.mxu0 0.0
  %965 = vmatpush2.msra.mxu0 0.0
  %966 = vmatprep.subr.mxu0 0.0
  %967 = vmatpush2.msra.mxu0 0.0
  %968 = vmatprep.subr.mxu0 0.0
  %969 = vmatpush2.msra.mxu0 0.0
  %970 = vmatprep.subr.mxu0 0.0
  %971 = vmatpush2.msra.mxu0 0.0
  %972 = vmatprep.subr.mxu0 0.0
  %973 = vmatpush2.msra.mxu0 0.0
  %974 = vmatprep.subr.mxu0 0.0
  %975 = vmatpush2.msra.mxu0 0.0
  %976 = vmatprep.subr.mxu0 0.0
  %977 = vmatpush2.msra.mxu0 0.0
  %978 = vmatprep.subr.mxu0 0.0
  %979 = vmatpush2.msra.mxu0 0.0
  %980 = vmatprep.subr.mxu0 0.0
  %981 = vmatpush2.msra.mxu0 0.0
  %982 = vmatprep.subr.mxu0 0.0
  %983 = vmatpush2.msra.mxu0 0.0
  %984 = vmatprep.mubr.f32.mxu0 0.0
  %985 = vmatmul.mubr.f32.gmra.mxu0 %v918
  %v986 = vpop.f32.mrf.mxu0
  %v987 = vadd.f32 0.0, %v986
  %v988 = vpop.f32.mrf.mxu0
  %989 = vdwg.mxu0
  %v990 = vadd.f32 %v916, %v987
  %v991 = vtanh.pop %v990
  %vm992 = vcmp.gt.f32.partialorder %v914, 0.5
  %v993 = vsel %vm992, 1, 0
  %994 = vset.pattern.permute.xlu0 0
  %995 = vperm.xlu0 %994, %v993
  %v996 = vpop.permute.xlu0 %995
  %vm997 = vcmp.eq.s32.totalorder %v996, 1
  %v998 = vsel %vm997, %v991, %v910
  %s999 = scalar_lea.vmem %s7, 48
  %1000 = vst.msk [vmem:[%s999] sm:$0xff] %vm370, %v998
  %s1001 = scalar_lea.vmem %s2, 56
  %v1002 = vld [vmem:[%s1001] sm:$0xff]
  %s1003 = scalar_lea.vmem [#allocation3], 56
  %v1004 = vld [vmem:[%s1003] sm:$0xff]
  %v1006 = vsel %vm370, %v998, 0
  %1008 = vmatprep.subr.mxu0 0.0
  %1009 = vmatpush1.msra.mxu0 0.0
  %1010 = vmatprep.subr.mxu0 0.0
  %1011 = vmatpush1.msra.mxu0 0.0
  %1012 = vmatprep.subr.mxu0 0.0
  %1013 = vmatpush1.msra.mxu0 0.0
  %1014 = vmatprep.subr.mxu0 0.0
  %1015 = vmatpush1.msra.mxu0 0.0
  %1016 = vmatprep.subr.mxu0 0.0
  %1017 = vmatpush1.msra.mxu0 0.0
  %1018 = vmatprep.subr.mxu0 0.0
  %1019 = vmatpush1.msra.mxu0 0.0
  %1020 = vmatprep.subr.mxu0 0.0
  %1021 = vmatpush1.msra.mxu0 0.0
  %1022 = vmatprep.subr.mxu0 0.0
  %1023 = vmatpush1.msra.mxu0 0.0
  %1024 = vmatprep.subr.mxu0 0.0
  %1025 = vmatpush1.msra.mxu0 %v386
  %1026 = vmatprep.subr.mxu0 0.0
  %1027 = vmatpush1.msra.mxu0 %v385
  %1028 = vmatprep.subr.mxu0 0.0
  %1029 = vmatpush1.msra.mxu0 %v384
  %1030 = vmatprep.subr.mxu0 0.0
  %1031 = vmatpush1.msra.mxu0 %v383
  %1032 = vmatprep.subr.mxu0 0.0
  %1033 = vmatpush1.msra.mxu0 %v382
  %1034 = vmatprep.subr.mxu0 0.0
  %1035 = vmatpush1.msra.mxu0 %v381
  %1036 = vmatprep.subr.mxu0 0.0
  %1037 = vmatpush1.msra.mxu0 %v380
  %1038 = vmatprep.subr.mxu0 0.0
  %1039 = vmatpush1.msra.mxu0 %v379
  %1040 = vmatprep.subr.mxu0 0.0
  %1041 = vmatpush2.msra.mxu0 0.0
  %1042 = vmatprep.subr.mxu0 0.0
  %1043 = vmatpush2.msra.mxu0 0.0
  %1044 = vmatprep.subr.mxu0 0.0
  %1045 = vmatpush2.msra.mxu0 0.0
  %1046 = vmatprep.subr.mxu0 0.0
  %1047 = vmatpush2.msra.mxu0 0.0
  %1048 = vmatprep.subr.mxu0 0.0
  %1049 = vmatpush2.msra.mxu0 0.0
  %1050 = vmatprep.subr.mxu0 0.0
  %1051 = vmatpush2.msra.mxu0 0.0
  %1052 = vmatprep.subr.mxu0 0.0
  %1053 = vmatpush2.msra.mxu0 0.0
  %1054 = vmatprep.subr.mxu0 0.0
  %1055 = vmatpush2.msra.mxu0 0.0
  %1056 = vmatprep.subr.mxu0 0.0
  %1057 = vmatpush2.msra.mxu0 0.0
  %1058 = vmatprep.subr.mxu0 0.0
  %1059 = vmatpush2.msra.mxu0 0.0
  %1060 = vmatprep.subr.mxu0 0.0
  %1061 = vmatpush2.msra.mxu0 0.0
  %1062 = vmatprep.subr.mxu0 0.0
  %1063 = vmatpush2.msra.mxu0 0.0
  %1064 = vmatprep.subr.mxu0 0.0
  %1065 = vmatpush2.msra.mxu0 0.0
  %1066 = vmatprep.subr.mxu0 0.0
  %1067 = vmatpush2.msra.mxu0 0.0
  %1068 = vmatprep.subr.mxu0 0.0
  %1069 = vmatpush2.msra.mxu0 0.0
  %1070 = vmatprep.subr.mxu0 0.0
  %1071 = vmatpush2.msra.mxu0 0.0
  %1072 = vmatprep.mubr.f32.mxu0 0.0
  %1073 = vmatmul.mubr.f32.gmra.mxu0 %v1006
  %v1074 = vpop.f32.mrf.mxu0
  %v1075 = vadd.f32 0.0, %v1074
  %v1076 = vpop.f32.mrf.mxu0
  %1077 = vdwg.mxu0
  %v1078 = vadd.f32 %v1004, %v1075
  %v1079 = vtanh.pop %v1078
  %vm1080 = vcmp.gt.f32.partialorder %v1002, 0.5
  %v1081 = vsel %vm1080, 1, 0
  %1082 = vset.pattern.permute.xlu0 0
  %1083 = vperm.xlu0 %1082, %v1081
  %v1084 = vpop.permute.xlu0 %1083
  %vm1085 = vcmp.eq.s32.totalorder %v1084, 1
  %v1086 = vsel %vm1085, %v1079, %v998
  %s1087 = scalar_lea.vmem %s7, 56
  %1088 = vst.msk [vmem:[%s1087] sm:$0xff] %vm370, %v1086
  %1089 = vst.msk [vmem:[#allocation2] sm:$0xff] %vm370, %v1086
  // Predicated region
  $region34: #{bidirectional_rnn.1} parent=0 // pred_check
    _
  $region35: #{bidirectional_rnn.1} parent=0 // pred_check_branch
    %1091 = sbr.rel (0) target = $region37
  $region36: #{bidirectional_rnn.1} parent=0 // pred_region
    _
  $region37: #{bidirectional_rnn.1} parent=0 // pred_fallthru
    _
  // Predicated region
  $region38: #{bidirectional_rnn.1} parent=0 // pred_check
    _
  $region39: #{bidirectional_rnn.1} parent=0 // pred_check_branch
    %1093 = sbr.rel (0) target = $region41
  $region40: #{bidirectional_rnn.1} parent=0 // pred_region
    _
  $region41: #{bidirectional_rnn.1} parent=0 // pred_fallthru
    _

</llo_original>
